<compile_context>
chip_gen: v5e
topology: v5e:2x2
jax: 0.10.0
libtpu: 0.0.40
codegen_flags: <defaults>
</compile_context>

<pallas_src>
import math
import functools

import jax
import jax.numpy as jnp
from jax import lax
from jax.experimental import pallas as pl
from jax.experimental.pallas import tpu as pltpu


def _round_up(x, m):
    return (x + m - 1) // m * m


def _choose_toh(OH, OW, max_rows=512):
    """Largest divisor of OH whose row tile (TOH*OW) is <= max_rows and 8-aligned."""
    for t in range(OH, 0, -1):
        if OH % t:
            continue
        rows = t * OW
        if rows <= max_rows and (rows % 8 == 0 or t == OH):
            return t
    return OH


def _equal_conv2d_kernel(x_ref, w_ref, b_ref, o_ref, *, TOH, OW, C, K, stride, scale):
    # x_ref: (Hp, Wp, C)     padded NHWC input, one batch image (batch dim squeezed)
    # w_ref: (K*K*C, OCp)    weights with the K*K taps folded into the contraction dim
    # b_ref: (1, OCp)        zero-padded bias, float32
    # o_ref: (TOH*OW, OCp)   flat, lane-dense output row tile
    t = pl.program_id(1)
    h0 = pl.multiple_of(t * (TOH * stride), TOH * stride)
    TIH = (TOH - 1) * stride + K          # input rows needed by this tile (incl. halo)

    # One dynamic load of the halo window; every tap slice below is static.
    xw = x_ref[pl.ds(h0, TIH), :, :]      # (TIH, Wp, C)

    # im2col in VMEM: build the (TOH, OW, K*K*C) patch, tap-major then channel,
    # matching the [K, K, C, OCp] -> [K*K*C, OCp] weight flattening.
    taps = []
    for ki in range(K):
        for kj in range(K):
            taps.append(lax.slice(
                xw,
                (ki, kj, 0),
                (ki + (TOH - 1) * stride + 1, kj + (OW - 1) * stride + 1, C),
                (stride, stride, 1)))     # (TOH, OW, C)
    patch = jnp.concatenate(taps, axis=-1).reshape(TOH * OW, K * K * C)

    # Fold the equalized-LR scale into the small weight tile (not the big accumulator).
    w = w_ref[...] * scale                # (K*K*C, OCp)

    acc = jnp.dot(patch, w, preferred_element_type=jnp.float32)   # single MXU matmul
    acc = acc + b_ref[...]                # f32 epilogue
    o_ref[...] = acc.astype(o_ref.dtype)


def equal_conv2d(x_nchw, weight, bias=None, *, stride=1, padding=0, max_tile_rows=512):
    """EqualConv2d forward. x_nchw: [N, C, H, W]; weight: [OC, C, K, K]; bias: [OC]|None."""
    N, C, H, W = x_nchw.shape
    OC, _, K, _ = weight.shape
    scale = 1.0 / math.sqrt(C * K * K)

    Hp, Wp = H + 2 * padding, W + 2 * padding
    OH = (Hp - K) // stride + 1
    OW = (Wp - K) // stride + 1
    OCp = _round_up(OC, 128)              # lane-dense output; pad lanes sliced afterwards
    TOH = _choose_toh(OH, OW, max_tile_rows)
    NT = OH // TOH
    ROWS = TOH * OW

    # Layout plumbing in plain JAX (jit the wrapper so XLA fuses pad/transpose around
    # the custom call).
    x_nhwc = jnp.pad(jnp.transpose(x_nchw, (0, 2, 3, 1)),
                     ((0, 0), (padding, padding), (padding, padding), (0, 0)))
    w_kkco = jnp.transpose(weight, (2, 3, 1, 0))                       # (K, K, C, OC)
    w_kkco = jnp.pad(w_kkco, ((0, 0), (0, 0), (0, 0), (0, OCp - OC)))  # (K, K, C, OCp)
    w2 = w_kkco.reshape(K * K * C, OCp)
    if bias is None:
        b2 = jnp.zeros((1, OCp), jnp.float32)
    else:
        b2 = jnp.pad(bias.astype(jnp.float32), (0, OCp - OC)).reshape(1, OCp)

    kernel = functools.partial(
        _equal_conv2d_kernel, TOH=TOH, OW=OW, C=C, K=K, stride=stride, scale=scale)

    # VMEM budget: double-buffered x image + out tile, weights/bias, im2col patch, f32 acc.
    itemsize = x_nhwc.dtype.itemsize
    x_blk = Hp * Wp * C * itemsize
    o_blk = ROWS * OCp * itemsize
    scratch = ROWS * K * K * C * 4 + ROWS * OCp * 4
    vmem_est = 2 * x_blk + 2 * o_blk + K * K * C * OCp * 4 + OCp * 4 + scratch
    vmem_limit = int(min(max(vmem_est + (4 << 20), 16 << 20), 64 << 20))

    cost = pl.CostEstimate(
        flops=2 * N * OH * OW * K * K * C * OCp,
        transcendentals=0,
        bytes_accessed=N * (x_blk + OH * OW * OCp * itemsize) + K * K * C * OCp * 4)

    out_flat = pl.pallas_call(
        kernel,
        out_shape=jax.ShapeDtypeStruct((N, OH * OW, OCp), x_nchw.dtype),
        grid=(N, NT),
        in_specs=[
            # Per-image input block; constant across the row-tile axis (no re-DMA).
            pl.BlockSpec((None, Hp, Wp, C), lambda n, t: (n, 0, 0, 0)),
            pl.BlockSpec((K * K * C, OCp), lambda n, t: (0, 0)),
            pl.BlockSpec((1, OCp), lambda n, t: (0, 0)),
        ],
        out_specs=pl.BlockSpec((None, ROWS, OCp), lambda n, t: (n, t, 0)),
        compiler_params=pltpu.CompilerParams(
            dimension_semantics=("parallel", "parallel"),
            vmem_limit_bytes=vmem_limit),
        cost_estimate=cost,
    )(x_nhwc, w2, b2)

    out = out_flat.reshape(N, OH, OW, OCp)[..., :OC]   # HBM-side reshape + unpad
    return jnp.transpose(out, (0, 3, 1, 2))            # back to NCHW


def _reference(x_nchw, weight, bias, *, stride=1, padding=0):
    C = x_nchw.shape[1]
    K = weight.shape[-1]
    scale = 1.0 / math.sqrt(C * K * K)
    out = lax.conv_general_dilated(
        x_nchw, weight * scale,
        window_strides=(stride, stride),
        padding=((padding, padding), (padding, padding)),
        dimension_numbers=("NCHW", "OIHW", "NCHW"),
        precision=lax.Precision.HIGHEST,
    )
    if bias is not None:
        out = out + bias.reshape(1, -1, 1, 1)
    return out


if __name__ == "__main__":
    key = jax.random.PRNGKey(0)
    kx, kw, kx2, kw2 = jax.random.split(key, 4)

    # Config 1: the 3x3 / stride 1 / padding 1 conv used throughout DoubleConv2d.
    N, C, H, W = 2, 4, 16, 16
    OC, K, stride, padding = 8, 3, 1, 1
    x = jax.random.normal(kx, (N, C, H, W), jnp.float32)
    weight = jax.random.normal(kw, (OC, C, K, K), jnp.float32)
    bias = jnp.zeros((OC,), jnp.float32)   # module __init__ zero-initializes bias

    fn = jax.jit(functools.partial(equal_conv2d, stride=stride, padding=padding))
    out = jax.block_until_ready(fn(x, weight, bias))
    ref = jax.block_until_ready(_reference(x, weight, bias, stride=stride, padding=padding))
    assert out.shape == ref.shape, (out.shape, ref.shape)
    assert jnp.allclose(out, ref, rtol=1e-3, atol=1e-3), float(jnp.max(jnp.abs(out - ref)))

    # Config 2: wider channels, no bias, multiple row tiles (exercises the tile grid axis
    # and the lane-padded OC path at OCp=128).
    N2, C2, H2, W2 = 2, 32, 32, 32
    OC2 = 64
    x2 = jax.random.normal(kx2, (N2, C2, H2, W2), jnp.float32)
    w2 = jax.random.normal(kw2, (OC2, C2, 3, 3), jnp.float32)
    fn2 = jax.jit(functools.partial(equal_conv2d, stride=1, padding=1))
    out2 = jax.block_until_ready(fn2(x2, w2, None))
    ref2 = jax.block_until_ready(_reference(x2, w2, None, stride=1, padding=1))
    assert out2.shape == ref2.shape, (out2.shape, ref2.shape)
    assert jnp.allclose(out2, ref2, rtol=1e-3, atol=1e-3), float(jnp.max(jnp.abs(out2 - ref2)))

    # TODO(synk): full INet graph (EqualConv3d / DoubleDeconv3d decoder — DoubleDeconv3d is
    # not defined in the provided spec) is not reproduced here; this kernel implements the
    # EqualConv2d forward primitive that dominates the network.
    print("KERNEL_OK")
</pallas_src>

<mosaic_0001>
module attributes {stable_mosaic.version = 11 : i64} {
  func.func @_equal_conv2d_kernel(%arg0: i32, %arg1: i32, %arg2: memref<1x18x18x4xf32, #tpu.memory_space<vmem>>, %arg3: memref<36x128xf32, #tpu.memory_space<vmem>>, %arg4: memref<1x128xf32, #tpu.memory_space<vmem>>, %arg5: memref<1x256x128xf32, #tpu.memory_space<vmem>>) attributes {dimension_semantics = [#tpu.dimension_semantics<parallel>, #tpu.dimension_semantics<parallel>], iteration_bounds = array<i64: 2, 1>, scalar_prefetch = 0 : i64, scratch_operands = 0 : i64, tpu.core_type = #tpu.core_type<tc>, window_params = [{transform_indices = @transform_0, window_bounds = array<i64: 1, 18, 18, 4>}, {pipeline_mode = #tpu.pipeline_mode<synchronous>, transform_indices = @transform_1, window_bounds = array<i64: 36, 128>}, {pipeline_mode = #tpu.pipeline_mode<synchronous>, transform_indices = @transform_2, window_bounds = array<i64: 1, 128>}, {transform_indices = @transform_3, window_bounds = array<i64: 1, 256, 128>}]} {
    %c16_i32 = arith.constant 16 : i32
    %0 = arith.muli %arg1, %c16_i32 : i32
    %1 = tpu.assume_multiple %0, 16 : i32
    %c0 = arith.constant 0 : index
    %2 = arith.index_cast %1 : i32 to index
    %c0_0 = arith.constant 0 : index
    %c0_1 = arith.constant 0 : index
    %3 = vector.load %arg2[%c0, %2, %c0_0, %c0_1] : memref<1x18x18x4xf32, #tpu.memory_space<vmem>>, vector<1x18x18x4xf32>
    %4 = vector.shape_cast %3 : vector<1x18x18x4xf32> to vector<18x18x4xf32>
    %5 = vector.extract_strided_slice %4 {offsets = [0, 0, 0], sizes = [16, 16, 4], strides = [1, 1, 1]} : vector<18x18x4xf32> to vector<16x16x4xf32>
    %6 = vector.extract_strided_slice %4 {offsets = [0, 1, 0], sizes = [16, 16, 4], strides = [1, 1, 1]} : vector<18x18x4xf32> to vector<16x16x4xf32>
    %7 = vector.extract_strided_slice %4 {offsets = [0, 2, 0], sizes = [16, 16, 4], strides = [1, 1, 1]} : vector<18x18x4xf32> to vector<16x16x4xf32>
    %8 = vector.extract_strided_slice %4 {offsets = [1, 0, 0], sizes = [16, 16, 4], strides = [1, 1, 1]} : vector<18x18x4xf32> to vector<16x16x4xf32>
    %9 = vector.extract_strided_slice %4 {offsets = [1, 1, 0], sizes = [16, 16, 4], strides = [1, 1, 1]} : vector<18x18x4xf32> to vector<16x16x4xf32>
    %10 = vector.extract_strided_slice %4 {offsets = [1, 2, 0], sizes = [16, 16, 4], strides = [1, 1, 1]} : vector<18x18x4xf32> to vector<16x16x4xf32>
    %11 = vector.extract_strided_slice %4 {offsets = [2, 0, 0], sizes = [16, 16, 4], strides = [1, 1, 1]} : vector<18x18x4xf32> to vector<16x16x4xf32>
    %12 = vector.extract_strided_slice %4 {offsets = [2, 1, 0], sizes = [16, 16, 4], strides = [1, 1, 1]} : vector<18x18x4xf32> to vector<16x16x4xf32>
    %13 = vector.extract_strided_slice %4 {offsets = [2, 2, 0], sizes = [16, 16, 4], strides = [1, 1, 1]} : vector<18x18x4xf32> to vector<16x16x4xf32>
    %14 = tpu.concatenate %5, %6, %7, %8, %9, %10, %11, %12, %13 in 2 : vector<16x16x4xf32>, vector<16x16x4xf32>, vector<16x16x4xf32>, vector<16x16x4xf32>, vector<16x16x4xf32>, vector<16x16x4xf32>, vector<16x16x4xf32>, vector<16x16x4xf32>, vector<16x16x4xf32> -> vector<16x16x36xf32>
    %15 = vector.shape_cast %14 : vector<16x16x36xf32> to vector<256x36xf32>
    %c0_2 = arith.constant 0 : index
    %c0_3 = arith.constant 0 : index
    %16 = vector.load %arg3[%c0_2, %c0_3] : memref<36x128xf32, #tpu.memory_space<vmem>>, vector<36x128xf32>
    %cst = arith.constant 0.166666672 : f32
    %17 = vector.broadcast %cst : f32 to vector<36x128xf32>
    %18 = arith.mulf %16, %17 : vector<36x128xf32>
    %cst_4 = arith.constant dense<0.000000e+00> : vector<256x128xf32>
    %19 = tpu.matmul %15, %18, %cst_4 {dimension_numbers = #tpu.dot_dimension_numbers<[1], [0], [0], [1], [0, 0, 1, 1], [], []>} : vector<256x36xf32>, vector<36x128xf32>, vector<256x128xf32> -> vector<256x128xf32>
    %c0_5 = arith.constant 0 : index
    %c0_6 = arith.constant 0 : index
    %20 = vector.load %arg4[%c0_5, %c0_6] : memref<1x128xf32, #tpu.memory_space<vmem>>, vector<1x128xf32>
    %21 = vector.broadcast %20 : vector<1x128xf32> to vector<256x128xf32>
    %22 = arith.addf %19, %21 : vector<256x128xf32>
    %c0_7 = arith.constant 0 : index
    %c0_8 = arith.constant 0 : index
    %c0_9 = arith.constant 0 : index
    %23 = vector.load %arg5[%c0_7, %c0_8, %c0_9] : memref<1x256x128xf32, #tpu.memory_space<vmem>>, vector<1x256x128xf32>
    %24 = vector.shape_cast %23 : vector<1x256x128xf32> to vector<256x128xf32>
    %25 = vector.shape_cast %22 : vector<256x128xf32> to vector<1x256x128xf32>
    tpu.vector_store %arg5[%c0_7, %c0_8, %c0_9], %25 {strides = array<i32>} : memref<1x256x128xf32, #tpu.memory_space<vmem>>, vector<1x256x128xf32>,
    return
  }
  func.func @transform_0(%arg0: i32, %arg1: i32) -> (i32, i32, i32, i32) {
    %c0_i32 = arith.constant 0 : i32
    %c0_i32_0 = arith.constant 0 : i32
    %c0_i32_1 = arith.constant 0 : i32
    %c0_i32_2 = arith.constant 0 : i32
    return %arg0, %c0_i32, %c0_i32_0, %c0_i32_1 : i32, i32, i32, i32
  }
  func.func @transform_1(%arg0: i32, %arg1: i32) -> (i32, i32) {
    %c0_i32 = arith.constant 0 : i32
    %c0_i32_0 = arith.constant 0 : i32
    %c0_i32_1 = arith.constant 0 : i32
    return %c0_i32, %c0_i32_0 : i32, i32
  }
  func.func @transform_2(%arg0: i32, %arg1: i32) -> (i32, i32) {
    %c0_i32 = arith.constant 0 : i32
    %c0_i32_0 = arith.constant 0 : i32
    %c0_i32_1 = arith.constant 0 : i32
    return %c0_i32, %c0_i32_0 : i32, i32
  }
  func.func @transform_3(%arg0: i32, %arg1: i32) -> (i32, i32, i32) {
    %c0_i32 = arith.constant 0 : i32
    %c0_i32_0 = arith.constant 0 : i32
    return %arg0, %arg1, %c0_i32 : i32, i32, i32
  }
}

</mosaic_0001>

<llo_original>
// kernel: equal_conv2d.1
$region0: #{equal_conv2d.1}
  #allocation0 [shape = 'u32[]', space=smem, size = 0x4, offset = 0x4, fixed_abs, tag = 'smem constant byte address 0x4 - core index']
  #allocation1 [shape = 'u32[72,128]{1,0:T(1,128)}', space=vmem, size = 0x9000, scoped, tag = 'internal scratch']
  %s0 = inlined_call_operand.vmem [shape: f32[2,18,18,4], index: 0, kind: input, shape index: {}]
  %s1 = inlined_call_operand.vmem [shape: f32[36,128], index: 1, kind: input, shape index: {}]
  %s2 = inlined_call_operand.vmem [shape: f32[1,128], index: 2, kind: input, shape index: {}]
  %s3 = inlined_call_operand.vmem [shape: f32[2,256,128], index: 3, kind: output, shape index: {}]
  %s4 = sld [smem:[#allocation0]]
  $region45: #{equal_conv2d.1} parent=0
    _
  %s6 = ssub.s32 1, %s4
  %s7 = scalar_select 0, %s6, %s4
  loop: start=0, step=1, limit=4
  $region2: #{equal_conv2d.1} parent=0 // loop_pre_header
    _
  $region3: #{equal_conv2d.1} parent=0 // loop_header
    %s9 = sphi 0, %s13
    %p10 = scmp.ge.s32.totalorder %s9, 4
    %s16 = sphi 0, %s28
    %s17 = sphi 0, %s24
    %s18 = sphi 0, %s16
    %s19 = sphi 0, %s17
    %s20 = sphi 0, %s18
    %s21 = sphi 0, %s19
    %s31 = sphi 0, %s33
    %s34 = sphi 0, %s31
    %s35 = sphi 0, %s34
    %s51 = sphi 0, %s35
    %s55 = sphi 0, %s55
    %s57 = sphi 0, %s55
    %s58 = sphi 0, %s57
    %s72 = sphi 0, %s58
    %s76 = sphi 0, %s76
    %s78 = sphi 0, %s76
    %s79 = sphi 0, %s78
    %s93 = sphi 0, %s79
    %s101 = sphi 0, %s103
    %s104 = sphi 0, %s101
    %s105 = sphi 0, %s104
    %s121 = sphi 0, %s105
  $region4: #{equal_conv2d.1} parent=0 // loop_header_branch
    %12 = sbr.rel (%p10) target = $region8
  $region5: #{equal_conv2d.1} parent=0 // loop_body
    %s14 = ssub.s32 %s9, 1
    %s15 = ssub.s32 %s9, 2
    %s22 = sadd.s32 1, %s17
    %p23 = scmp.ge.s32.totalorder %s22, 1
    %s24 = scalar_select %p23, 0, %s22
    %s25 = sadd.s32 1, %s16
    %s26 = scalar_select %p23, %s25, %s16
    %p27 = scmp.ge.s32.totalorder %s26, 2
    %s28 = scalar_select %p27, 0, %s26
    %s29 = ssub.s32 %s16, %s28
    %p30 = scmp.eq.s32.totalorder %s29, 0
    %s32 = sadd.s32 %s31, 1
    %s33 = scalar_select %p30, %s31, %s32
    %p36 = pneg %p30
    %p37 = scmp.eq.s32.totalorder %s9, 1
    %p38 = por %p36, %p37
    %p39 = scmp.ne.s32.totalorder %s31, %s34
    %p40 = scmp.eq.s32.totalorder %s9, 0
    %p41 = por %p39, %p40
    %p42 = scmp.ne.s32.totalorder %s31, %s34
    %p43 = scmp.eq.s32.totalorder %s14, 1
    %p44 = por %p42, %p43
    %p45 = scmp.ne.s32.totalorder %s34, %s35
    %p46 = scmp.eq.s32.totalorder %s14, 0
    %p47 = por %p45, %p46
    %p48 = scmp.ne.s32.totalorder %s34, %s35
    %p49 = scmp.eq.s32.totalorder %s15, 1
    %p50 = por %p48, %p49
    %p52 = scmp.ne.s32.totalorder %s35, %s51
    %p53 = scmp.eq.s32.totalorder %s15, 0
    %p54 = por %p52, %p53
    %s56 = sadd.s32 %s55, 1
    %p59 = scmp.eq.s32.totalorder %s9, 1
    %p60 = scmp.ne.s32.totalorder %s55, %s57
    %p61 = scmp.eq.s32.totalorder %s9, 0
    %p62 = por %p60, %p61
    %p63 = scmp.ne.s32.totalorder %s55, %s57
    %p64 = scmp.eq.s32.totalorder %s14, 1
    %p65 = por %p63, %p64
    %p66 = scmp.ne.s32.totalorder %s57, %s58
    %p67 = scmp.eq.s32.totalorder %s14, 0
    %p68 = por %p66, %p67
    %p69 = scmp.ne.s32.totalorder %s57, %s58
    %p70 = scmp.eq.s32.totalorder %s15, 1
    %p71 = por %p69, %p70
    %p73 = scmp.ne.s32.totalorder %s58, %s72
    %p74 = scmp.eq.s32.totalorder %s15, 0
    %p75 = por %p73, %p74
    %s77 = sadd.s32 %s76, 1
    %p80 = scmp.eq.s32.totalorder %s9, 1
    %p81 = scmp.ne.s32.totalorder %s76, %s78
    %p82 = scmp.eq.s32.totalorder %s9, 0
    %p83 = por %p81, %p82
    %p84 = scmp.ne.s32.totalorder %s76, %s78
    %p85 = scmp.eq.s32.totalorder %s14, 1
    %p86 = por %p84, %p85
    %p87 = scmp.ne.s32.totalorder %s78, %s79
    %p88 = scmp.eq.s32.totalorder %s14, 0
    %p89 = por %p87, %p88
    %p90 = scmp.ne.s32.totalorder %s78, %s79
    %p91 = scmp.eq.s32.totalorder %s15, 1
    %p92 = por %p90, %p91
    %p94 = scmp.ne.s32.totalorder %s79, %s93
    %p95 = scmp.eq.s32.totalorder %s15, 0
    %p96 = por %p94, %p95
    %s97 = ssub.s32 %s16, %s28
    %s98 = ssub.s32 %s17, %s24
    %s99 = sor.u32 %s97, %s98
    %p100 = scmp.eq.s32.totalorder %s99, 0
    %s102 = sadd.s32 %s101, 1
    %s103 = scalar_select %p100, %s101, %s102
    %p106 = pneg %p100
    %p107 = scmp.eq.s32.totalorder %s9, 1
    %p108 = por %p106, %p107
    %p109 = scmp.ne.s32.totalorder %s101, %s104
    %p110 = scmp.eq.s32.totalorder %s9, 0
    %p111 = por %p109, %p110
    %p112 = scmp.ne.s32.totalorder %s101, %s104
    %p113 = scmp.eq.s32.totalorder %s14, 1
    %p114 = por %p112, %p113
    %p115 = scmp.ne.s32.totalorder %s104, %s105
    %p116 = scmp.eq.s32.totalorder %s14, 0
    %p117 = por %p115, %p116
    %p118 = scmp.ne.s32.totalorder %s104, %s105
    %p119 = scmp.eq.s32.totalorder %s15, 1
    %p120 = por %p118, %p119
    %p122 = scmp.ne.s32.totalorder %s105, %s121
    %p123 = scmp.eq.s32.totalorder %s15, 0
    %p124 = por %p122, %p123
    %p125 = scmp.le.s32.totalorder 1, %s9
    %p126 = scmp.lt.s32.totalorder %s9, 3
    %p127 = pnand %p125, %p126
    %p128 = pneg %p127
    // Predicated region
    $region9: #{equal_conv2d.1} parent=5 // pred_check
      _
    $region10: #{equal_conv2d.1} parent=5 // pred_check_branch
      %130 = sbr.rel (%p127) target = $region12
    $region11: #{equal_conv2d.1} parent=5 // pred_region
      %s131 = ssub.s32 %s9, 1
      // Predicated region
      $region13: #{equal_conv2d.1} parent=11 // pred_check
        %p132 = pneg %p68
      $region14: #{equal_conv2d.1} parent=11 // pred_check_branch
        %134 = sbr.rel (%p132) target = $region16
      $region15: #{equal_conv2d.1} parent=11 // pred_region
        _
      $region16: #{equal_conv2d.1} parent=11 // pred_fallthru
        _
      // Predicated region
      $region17: #{equal_conv2d.1} parent=11 // pred_check
        %p135 = pneg %p89
      $region18: #{equal_conv2d.1} parent=11 // pred_check_branch
        %137 = sbr.rel (%p135) target = $region20
      $region19: #{equal_conv2d.1} parent=11 // pred_region
        _
      $region20: #{equal_conv2d.1} parent=11 // pred_fallthru
        _
    $region12: #{equal_conv2d.1} parent=5 // pred_fallthru
      _
    %p138 = scmp.lt.s32.totalorder %s9, 2
    // Predicated region
    $region21: #{equal_conv2d.1} parent=5 // pred_check
      %p139 = pneg %p138
    $region22: #{equal_conv2d.1} parent=5 // pred_check_branch
      %141 = sbr.rel (%p139) target = $region24
    $region23: #{equal_conv2d.1} parent=5 // pred_region
      // Predicated region
      $region25: #{equal_conv2d.1} parent=23 // pred_check
        %p142 = pneg %p41
      $region26: #{equal_conv2d.1} parent=23 // pred_check_branch
        %144 = sbr.rel (%p142) target = $region28
      $region27: #{equal_conv2d.1} parent=23 // pred_region
        %p145 = scmp.lt.s32.totalorder %s16, 1
        %s146 = scalar_select %p145, %s16, 1
        %s147 = smul.addr %s146, 54
        %s148 = smul.addr %s147, 8
        %s149 = scalar_lea.vmem %s0, %s148
      $region28: #{equal_conv2d.1} parent=23 // pred_fallthru
        _
    $region24: #{equal_conv2d.1} parent=5 // pred_fallthru
      _
    %p150 = scmp.le.s32.totalorder 1, %s9
    %p151 = scmp.lt.s32.totalorder %s9, 3
    %p152 = pnand %p150, %p151
    %p153 = pneg %p152
    // Predicated region
    $region29: #{equal_conv2d.1} parent=5 // pred_check
      _
    $region30: #{equal_conv2d.1} parent=5 // pred_check_branch
      %155 = sbr.rel (%p152) target = $region32
    $region31: #{equal_conv2d.1} parent=5 // pred_region
      %s156 = ssub.s32 %s9, 1
      %p157 = scmp.lt.s32.totalorder %s18, 1
      %s158 = scalar_select %p157, %s18, 1
      %s159 = smul.addr %s158, 54
      %s160 = smul.addr %s159, 8
      %s161 = scalar_lea.vmem %s0, %s160
      %p162 = pneg %p47
      %p163 = pneg %p44
      %p164 = pneg %p68
      %p165 = pneg %p65
      %p166 = pneg %p89
      %p167 = pneg %p86
      %p168 = pneg %p117
      %p169 = pneg %p114
      %s170 = smul.u32 32, %s19
      %p171 = scmp.lt.s32.totalorder %s18, 1
      %s172 = scalar_select %p171, %s18, 1
      %p173 = scmp.lt.s32.totalorder %s170, 31
      %s174 = scalar_select %p173, %s170, 31
      %s175 = smul.addr %s172, 32
      %s176 = sadd.s32 %s174, %s175
      %s177 = smul.addr %s176, 8
      %s178 = scalar_lea.vmem %s3, %s177
      %p179 = scmp.lt.s32.totalorder %s18, 1
      %s180 = scalar_select %p179, %s18, 1
      %s181 = smul.addr %s180, 54
      %s182 = smul.addr %s181, 8
      %s183 = scalar_lea.vmem %s0, %s182
      %s184 = smul.u32 32, %s19
      %p185 = scmp.lt.s32.totalorder %s18, 1
      %s186 = scalar_select %p185, %s18, 1
      %p187 = scmp.lt.s32.totalorder %s184, 31
      %s188 = scalar_select %p187, %s184, 31
      %s189 = smul.addr %s186, 32
      %s190 = sadd.s32 %s188, %s189
      %s191 = smul.addr %s190, 8
      %s192 = scalar_lea.vmem %s3, %s191
      %s193 = smul.u32 32, %s19
      %s194 = smul.u32 %s19, 16
      %s195 = smul.u32 %s194, 24
      %s196 = scalar_lea.vmem %s183, %s195
      %v197 = vld [vmem:[%s196] sm:$0xff]
      %v198 = vld [vmem:[%s196 + $0x8] sm:$0xff]
      %v199 = vld [vmem:[%s196 + $0x10] sm:$0x3]
      %v200 = vld [vmem:[%s196 + $0x18] sm:$0xff]
      %v201 = vld [vmem:[%s196 + $0x20] sm:$0xff]
      %v202 = vld [vmem:[%s196 + $0x28] sm:$0x3]
      %v203 = vld [vmem:[%s196 + $0x30] sm:$0xff]
      %v204 = vld [vmem:[%s196 + $0x38] sm:$0xff]
      %v205 = vld [vmem:[%s196 + $0x40] sm:$0x3]
      %v206 = vld [vmem:[%s196 + $0x48] sm:$0xff]
      %v207 = vld [vmem:[%s196 + $0x50] sm:$0xff]
      %v208 = vld [vmem:[%s196 + $0x58] sm:$0x3]
      %v209 = vld [vmem:[%s196 + $0x60] sm:$0xff]
      %v210 = vld [vmem:[%s196 + $0x68] sm:$0xff]
      %v211 = vld [vmem:[%s196 + $0x70] sm:$0x3]
      %v212 = vld [vmem:[%s196 + $0x78] sm:$0xff]
      %v213 = vld [vmem:[%s196 + $0x80] sm:$0xff]
      %v214 = vld [vmem:[%s196 + $0x88] sm:$0x3]
      %v215 = vld [vmem:[%s196 + $0x90] sm:$0xff]
      %v216 = vld [vmem:[%s196 + $0x98] sm:$0xff]
      %v217 = vld [vmem:[%s196 + $0xa0] sm:$0x3]
      %v218 = vld [vmem:[%s196 + $0xa8] sm:$0xff]
      %v219 = vld [vmem:[%s196 + $0xb0] sm:$0xff]
      %v220 = vld [vmem:[%s196 + $0xb8] sm:$0x3]
      %v221 = vld [vmem:[%s196 + $0xc0] sm:$0xff]
      %v222 = vld [vmem:[%s196 + $0xc8] sm:$0xff]
      %v223 = vld [vmem:[%s196 + $0xd0] sm:$0x3]
      %v224 = vld [vmem:[%s196 + $0xd8] sm:$0xff]
      %v225 = vld [vmem:[%s196 + $0xe0] sm:$0xff]
      %v226 = vld [vmem:[%s196 + $0xe8] sm:$0x3]
      %v227 = vld [vmem:[%s196 + $0xf0] sm:$0xff]
      %v228 = vld [vmem:[%s196 + $0xf8] sm:$0xff]
      %v229 = vld [vmem:[%s196 + $0x100] sm:$0x3]
      %v230 = vld [vmem:[%s196 + $0x108] sm:$0xff]
      %v231 = vld [vmem:[%s196 + $0x110] sm:$0xff]
      %v232 = vld [vmem:[%s196 + $0x118] sm:$0x3]
      %v233 = vld [vmem:[%s196 + $0x120] sm:$0xff]
      %v234 = vld [vmem:[%s196 + $0x128] sm:$0xff]
      %v235 = vld [vmem:[%s196 + $0x130] sm:$0x3]
      %v236 = vld [vmem:[%s196 + $0x138] sm:$0xff]
      %v237 = vld [vmem:[%s196 + $0x140] sm:$0xff]
      %v238 = vld [vmem:[%s196 + $0x148] sm:$0x3]
      %v239 = vld [vmem:[%s196 + $0x150] sm:$0xff]
      %v240 = vld [vmem:[%s196 + $0x158] sm:$0xff]
      %v241 = vld [vmem:[%s196 + $0x160] sm:$0x3]
      %v242 = vld [vmem:[%s196 + $0x168] sm:$0xff]
      %v243 = vld [vmem:[%s196 + $0x170] sm:$0xff]
      %v244 = vld [vmem:[%s196 + $0x178] sm:$0x3]
      %v245 = vld [vmem:[%s196 + $0x180] sm:$0xff]
      %v246 = vld [vmem:[%s196 + $0x188] sm:$0xff]
      %v247 = vld [vmem:[%s196 + $0x190] sm:$0x3]
      %v248 = vld [vmem:[%s196 + $0x198] sm:$0xff]
      %v249 = vld [vmem:[%s196 + $0x1a0] sm:$0xff]
      %v250 = vld [vmem:[%s196 + $0x1a8] sm:$0x3]
      %vm299 = vcmask 1046528
      %v300 = vrot.slane %v197, 1
      %v301 = vrot.slane %v198, 1
      %v302 = vsel %vm299, %v300, %v301
      %v303 = vrot.slane %v199, 1
      %v304 = vsel %vm299, %v301, %v303
      %v305 = vrot.slane %v200, 1
      %v306 = vrot.slane %v201, 1
      %v307 = vsel %vm299, %v305, %v306
      %v308 = vrot.slane %v202, 1
      %v309 = vsel %vm299, %v306, %v308
      %v310 = vrot.slane %v203, 1
      %v311 = vrot.slane %v204, 1
      %v312 = vsel %vm299, %v310, %v311
      %v313 = vrot.slane %v205, 1
      %v314 = vsel %vm299, %v311, %v313
      %v315 = vrot.slane %v206, 1
      %v316 = vrot.slane %v207, 1
      %v317 = vsel %vm299, %v315, %v316
      %v318 = vrot.slane %v208, 1
      %v319 = vsel %vm299, %v316, %v318
      %v320 = vrot.slane %v209, 1
      %v321 = vrot.slane %v210, 1
      %v322 = vsel %vm299, %v320, %v321
      %v323 = vrot.slane %v211, 1
      %v324 = vsel %vm299, %v321, %v323
      %v325 = vrot.slane %v212, 1
      %v326 = vrot.slane %v213, 1
      %v327 = vsel %vm299, %v325, %v326
      %v328 = vrot.slane %v214, 1
      %v329 = vsel %vm299, %v326, %v328
      %v330 = vrot.slane %v215, 1
      %v331 = vrot.slane %v216, 1
      %v332 = vsel %vm299, %v330, %v331
      %v333 = vrot.slane %v217, 1
      %v334 = vsel %vm299, %v331, %v333
      %v335 = vrot.slane %v218, 1
      %v336 = vrot.slane %v219, 1
      %v337 = vsel %vm299, %v335, %v336
      %v338 = vrot.slane %v220, 1
      %v339 = vsel %vm299, %v336, %v338
      %v340 = vrot.slane %v221, 1
      %v341 = vrot.slane %v222, 1
      %v342 = vsel %vm299, %v340, %v341
      %v343 = vrot.slane %v223, 1
      %v344 = vsel %vm299, %v341, %v343
      %v345 = vrot.slane %v224, 1
      %v346 = vrot.slane %v225, 1
      %v347 = vsel %vm299, %v345, %v346
      %v348 = vrot.slane %v226, 1
      %v349 = vsel %vm299, %v346, %v348
      %v350 = vrot.slane %v227, 1
      %v351 = vrot.slane %v228, 1
      %v352 = vsel %vm299, %v350, %v351
      %v353 = vrot.slane %v229, 1
      %v354 = vsel %vm299, %v351, %v353
      %v355 = vrot.slane %v230, 1
      %v356 = vrot.slane %v231, 1
      %v357 = vsel %vm299, %v355, %v356
      %v358 = vrot.slane %v232, 1
      %v359 = vsel %vm299, %v356, %v358
      %v360 = vrot.slane %v233, 1
      %v361 = vrot.slane %v234, 1
      %v362 = vsel %vm299, %v360, %v361
      %v363 = vrot.slane %v235, 1
      %v364 = vsel %vm299, %v361, %v363
      %v365 = vrot.slane %v236, 1
      %v366 = vrot.slane %v237, 1
      %v367 = vsel %vm299, %v365, %v366
      %v368 = vrot.slane %v238, 1
      %v369 = vsel %vm299, %v366, %v368
      %v370 = vrot.slane %v239, 1
      %v371 = vrot.slane %v240, 1
      %v372 = vsel %vm299, %v370, %v371
      %v373 = vrot.slane %v241, 1
      %v374 = vsel %vm299, %v371, %v373
      %v375 = vrot.slane %v242, 1
      %v376 = vrot.slane %v243, 1
      %v377 = vsel %vm299, %v375, %v376
      %v378 = vrot.slane %v244, 1
      %v379 = vsel %vm299, %v376, %v378
      %380 = vrot.lane.b32.xlu0 %v302, 4
      %v381 = vpop.permute.xlu0 %380
      %382 = vrot.lane.b32.xlu0 %v304, 4
      %v383 = vpop.permute.xlu0 %382
      %384 = vrot.lane.b32.xlu0 %v307, 4
      %v385 = vpop.permute.xlu0 %384
      %386 = vrot.lane.b32.xlu0 %v309, 4
      %v387 = vpop.permute.xlu0 %386
      %388 = vrot.lane.b32.xlu0 %v312, 4
      %v389 = vpop.permute.xlu0 %388
      %390 = vrot.lane.b32.xlu0 %v314, 4
      %v391 = vpop.permute.xlu0 %390
      %392 = vrot.lane.b32.xlu0 %v317, 4
      %v393 = vpop.permute.xlu0 %392
      %394 = vrot.lane.b32.xlu0 %v319, 4
      %v395 = vpop.permute.xlu0 %394
      %396 = vrot.lane.b32.xlu0 %v322, 4
      %v397 = vpop.permute.xlu0 %396
      %398 = vrot.lane.b32.xlu0 %v324, 4
      %v399 = vpop.permute.xlu0 %398
      %400 = vrot.lane.b32.xlu0 %v327, 4
      %v401 = vpop.permute.xlu0 %400
      %402 = vrot.lane.b32.xlu0 %v329, 4
      %v403 = vpop.permute.xlu0 %402
      %404 = vrot.lane.b32.xlu0 %v332, 4
      %v405 = vpop.permute.xlu0 %404
      %406 = vrot.lane.b32.xlu0 %v334, 4
      %v407 = vpop.permute.xlu0 %406
      %408 = vrot.lane.b32.xlu0 %v337, 4
      %v409 = vpop.permute.xlu0 %408
      %410 = vrot.lane.b32.xlu0 %v339, 4
      %v411 = vpop.permute.xlu0 %410
      %412 = vrot.lane.b32.xlu0 %v342, 4
      %v413 = vpop.permute.xlu0 %412
      %414 = vrot.lane.b32.xlu0 %v344, 4
      %v415 = vpop.permute.xlu0 %414
      %416 = vrot.lane.b32.xlu0 %v347, 4
      %v417 = vpop.permute.xlu0 %416
      %418 = vrot.lane.b32.xlu0 %v349, 4
      %v419 = vpop.permute.xlu0 %418
      %420 = vrot.lane.b32.xlu0 %v352, 4
      %v421 = vpop.permute.xlu0 %420
      %422 = vrot.lane.b32.xlu0 %v354, 4
      %v423 = vpop.permute.xlu0 %422
      %424 = vrot.lane.b32.xlu0 %v357, 4
      %v425 = vpop.permute.xlu0 %424
      %426 = vrot.lane.b32.xlu0 %v359, 4
      %v427 = vpop.permute.xlu0 %426
      %428 = vrot.lane.b32.xlu0 %v362, 4
      %v429 = vpop.permute.xlu0 %428
      %430 = vrot.lane.b32.xlu0 %v364, 4
      %v431 = vpop.permute.xlu0 %430
      %432 = vrot.lane.b32.xlu0 %v367, 4
      %v433 = vpop.permute.xlu0 %432
      %434 = vrot.lane.b32.xlu0 %v369, 4
      %v435 = vpop.permute.xlu0 %434
      %436 = vrot.lane.b32.xlu0 %v372, 4
      %v437 = vpop.permute.xlu0 %436
      %438 = vrot.lane.b32.xlu0 %v374, 4
      %v439 = vpop.permute.xlu0 %438
      %440 = vrot.lane.b32.xlu0 %v377, 4
      %v441 = vpop.permute.xlu0 %440
      %442 = vrot.lane.b32.xlu0 %v379, 4
      %v443 = vpop.permute.xlu0 %442
      %vm476 = vcmask 1045504
      %v477 = vrot.slane %v197, 2
      %v478 = vrot.slane %v198, 2
      %v479 = vsel %vm476, %v477, %v478
      %v480 = vrot.slane %v199, 2
      %v481 = vsel %vm476, %v478, %v480
      %v482 = vrot.slane %v200, 2
      %v483 = vrot.slane %v201, 2
      %v484 = vsel %vm476, %v482, %v483
      %v485 = vrot.slane %v202, 2
      %v486 = vsel %vm476, %v483, %v485
      %v487 = vrot.slane %v203, 2
      %v488 = vrot.slane %v204, 2
      %v489 = vsel %vm476, %v487, %v488
      %v490 = vrot.slane %v205, 2
      %v491 = vsel %vm476, %v488, %v490
      %v492 = vrot.slane %v206, 2
      %v493 = vrot.slane %v207, 2
      %v494 = vsel %vm476, %v492, %v493
      %v495 = vrot.slane %v208, 2
      %v496 = vsel %vm476, %v493, %v495
      %v497 = vrot.slane %v209, 2
      %v498 = vrot.slane %v210, 2
      %v499 = vsel %vm476, %v497, %v498
      %v500 = vrot.slane %v211, 2
      %v501 = vsel %vm476, %v498, %v500
      %v502 = vrot.slane %v212, 2
      %v503 = vrot.slane %v213, 2
      %v504 = vsel %vm476, %v502, %v503
      %v505 = vrot.slane %v214, 2
      %v506 = vsel %vm476, %v503, %v505
      %v507 = vrot.slane %v215, 2
      %v508 = vrot.slane %v216, 2
      %v509 = vsel %vm476, %v507, %v508
      %v510 = vrot.slane %v217, 2
      %v511 = vsel %vm476, %v508, %v510
      %v512 = vrot.slane %v218, 2
      %v513 = vrot.slane %v219, 2
      %v514 = vsel %vm476, %v512, %v513
      %v515 = vrot.slane %v220, 2
      %v516 = vsel %vm476, %v513, %v515
      %v517 = vrot.slane %v221, 2
      %v518 = vrot.slane %v222, 2
      %v519 = vsel %vm476, %v517, %v518
      %v520 = vrot.slane %v223, 2
      %v521 = vsel %vm476, %v518, %v520
      %v522 = vrot.slane %v224, 2
      %v523 = vrot.slane %v225, 2
      %v524 = vsel %vm476, %v522, %v523
      %v525 = vrot.slane %v226, 2
      %v526 = vsel %vm476, %v523, %v525
      %v527 = vrot.slane %v227, 2
      %v528 = vrot.slane %v228, 2
      %v529 = vsel %vm476, %v527, %v528
      %v530 = vrot.slane %v229, 2
      %v531 = vsel %vm476, %v528, %v530
      %v532 = vrot.slane %v230, 2
      %v533 = vrot.slane %v231, 2
      %v534 = vsel %vm476, %v532, %v533
      %v535 = vrot.slane %v232, 2
      %v536 = vsel %vm476, %v533, %v535
      %v537 = vrot.slane %v233, 2
      %v538 = vrot.slane %v234, 2
      %v539 = vsel %vm476, %v537, %v538
      %v540 = vrot.slane %v235, 2
      %v541 = vsel %vm476, %v538, %v540
      %v542 = vrot.slane %v236, 2
      %v543 = vrot.slane %v237, 2
      %v544 = vsel %vm476, %v542, %v543
      %v545 = vrot.slane %v238, 2
      %v546 = vsel %vm476, %v543, %v545
      %v547 = vrot.slane %v239, 2
      %v548 = vrot.slane %v240, 2
      %v549 = vsel %vm476, %v547, %v548
      %v550 = vrot.slane %v241, 2
      %v551 = vsel %vm476, %v548, %v550
      %v552 = vrot.slane %v242, 2
      %v553 = vrot.slane %v243, 2
      %v554 = vsel %vm476, %v552, %v553
      %v555 = vrot.slane %v244, 2
      %v556 = vsel %vm476, %v553, %v555
      %557 = vrot.lane.b32.xlu0 %v479, 8
      %v558 = vpop.permute.xlu0 %557
      %559 = vrot.lane.b32.xlu0 %v481, 8
      %v560 = vpop.permute.xlu0 %559
      %561 = vrot.lane.b32.xlu0 %v484, 8
      %v562 = vpop.permute.xlu0 %561
      %563 = vrot.lane.b32.xlu0 %v486, 8
      %v564 = vpop.permute.xlu0 %563
      %565 = vrot.lane.b32.xlu0 %v489, 8
      %v566 = vpop.permute.xlu0 %565
      %567 = vrot.lane.b32.xlu0 %v491, 8
      %v568 = vpop.permute.xlu0 %567
      %569 = vrot.lane.b32.xlu0 %v494, 8
      %v570 = vpop.permute.xlu0 %569
      %571 = vrot.lane.b32.xlu0 %v496, 8
      %v572 = vpop.permute.xlu0 %571
      %573 = vrot.lane.b32.xlu0 %v499, 8
      %v574 = vpop.permute.xlu0 %573
      %575 = vrot.lane.b32.xlu0 %v501, 8
      %v576 = vpop.permute.xlu0 %575
      %577 = vrot.lane.b32.xlu0 %v504, 8
      %v578 = vpop.permute.xlu0 %577
      %579 = vrot.lane.b32.xlu0 %v506, 8
      %v580 = vpop.permute.xlu0 %579
      %581 = vrot.lane.b32.xlu0 %v509, 8
      %v582 = vpop.permute.xlu0 %581
      %583 = vrot.lane.b32.xlu0 %v511, 8
      %v584 = vpop.permute.xlu0 %583
      %585 = vrot.lane.b32.xlu0 %v514, 8
      %v586 = vpop.permute.xlu0 %585
      %587 = vrot.lane.b32.xlu0 %v516, 8
      %v588 = vpop.permute.xlu0 %587
      %589 = vrot.lane.b32.xlu0 %v519, 8
      %v590 = vpop.permute.xlu0 %589
      %591 = vrot.lane.b32.xlu0 %v521, 8
      %v592 = vpop.permute.xlu0 %591
      %593 = vrot.lane.b32.xlu0 %v524, 8
      %v594 = vpop.permute.xlu0 %593
      %595 = vrot.lane.b32.xlu0 %v526, 8
      %v596 = vpop.permute.xlu0 %595
      %597 = vrot.lane.b32.xlu0 %v529, 8
      %v598 = vpop.permute.xlu0 %597
      %599 = vrot.lane.b32.xlu0 %v531, 8
      %v600 = vpop.permute.xlu0 %599
      %601 = vrot.lane.b32.xlu0 %v534, 8
      %v602 = vpop.permute.xlu0 %601
      %603 = vrot.lane.b32.xlu0 %v536, 8
      %v604 = vpop.permute.xlu0 %603
      %605 = vrot.lane.b32.xlu0 %v539, 8
      %v606 = vpop.permute.xlu0 %605
      %607 = vrot.lane.b32.xlu0 %v541, 8
      %v608 = vpop.permute.xlu0 %607
      %609 = vrot.lane.b32.xlu0 %v544, 8
      %v610 = vpop.permute.xlu0 %609
      %611 = vrot.lane.b32.xlu0 %v546, 8
      %v612 = vpop.permute.xlu0 %611
      %613 = vrot.lane.b32.xlu0 %v549, 8
      %v614 = vpop.permute.xlu0 %613
      %615 = vrot.lane.b32.xlu0 %v551, 8
      %v616 = vpop.permute.xlu0 %615
      %617 = vrot.lane.b32.xlu0 %v554, 8
      %v618 = vpop.permute.xlu0 %617
      %619 = vrot.lane.b32.xlu0 %v556, 8
      %v620 = vpop.permute.xlu0 %619
      %655 = vrot.lane.b32.xlu0 %v200, 12
      %v656 = vpop.permute.xlu0 %655
      %657 = vrot.lane.b32.xlu0 %v201, 12
      %v658 = vpop.permute.xlu0 %657
      %659 = vrot.lane.b32.xlu0 %v203, 12
      %v660 = vpop.permute.xlu0 %659
      %661 = vrot.lane.b32.xlu0 %v204, 12
      %v662 = vpop.permute.xlu0 %661
      %663 = vrot.lane.b32.xlu0 %v206, 12
      %v664 = vpop.permute.xlu0 %663
      %665 = vrot.lane.b32.xlu0 %v207, 12
      %v666 = vpop.permute.xlu0 %665
      %667 = vrot.lane.b32.xlu0 %v209, 12
      %v668 = vpop.permute.xlu0 %667
      %669 = vrot.lane.b32.xlu0 %v210, 12
      %v670 = vpop.permute.xlu0 %669
      %671 = vrot.lane.b32.xlu0 %v212, 12
      %v672 = vpop.permute.xlu0 %671
      %673 = vrot.lane.b32.xlu0 %v213, 12
      %v674 = vpop.permute.xlu0 %673
      %675 = vrot.lane.b32.xlu0 %v215, 12
      %v676 = vpop.permute.xlu0 %675
      %677 = vrot.lane.b32.xlu0 %v216, 12
      %v678 = vpop.permute.xlu0 %677
      %679 = vrot.lane.b32.xlu0 %v218, 12
      %v680 = vpop.permute.xlu0 %679
      %681 = vrot.lane.b32.xlu0 %v219, 12
      %v682 = vpop.permute.xlu0 %681
      %683 = vrot.lane.b32.xlu0 %v221, 12
      %v684 = vpop.permute.xlu0 %683
      %685 = vrot.lane.b32.xlu0 %v222, 12
      %v686 = vpop.permute.xlu0 %685
      %687 = vrot.lane.b32.xlu0 %v224, 12
      %v688 = vpop.permute.xlu0 %687
      %689 = vrot.lane.b32.xlu0 %v225, 12
      %v690 = vpop.permute.xlu0 %689
      %691 = vrot.lane.b32.xlu0 %v227, 12
      %v692 = vpop.permute.xlu0 %691
      %693 = vrot.lane.b32.xlu0 %v228, 12
      %v694 = vpop.permute.xlu0 %693
      %695 = vrot.lane.b32.xlu0 %v230, 12
      %v696 = vpop.permute.xlu0 %695
      %697 = vrot.lane.b32.xlu0 %v231, 12
      %v698 = vpop.permute.xlu0 %697
      %699 = vrot.lane.b32.xlu0 %v233, 12
      %v700 = vpop.permute.xlu0 %699
      %701 = vrot.lane.b32.xlu0 %v234, 12
      %v702 = vpop.permute.xlu0 %701
      %703 = vrot.lane.b32.xlu0 %v236, 12
      %v704 = vpop.permute.xlu0 %703
      %705 = vrot.lane.b32.xlu0 %v237, 12
      %v706 = vpop.permute.xlu0 %705
      %707 = vrot.lane.b32.xlu0 %v239, 12
      %v708 = vpop.permute.xlu0 %707
      %709 = vrot.lane.b32.xlu0 %v240, 12
      %v710 = vpop.permute.xlu0 %709
      %711 = vrot.lane.b32.xlu0 %v242, 12
      %v712 = vpop.permute.xlu0 %711
      %713 = vrot.lane.b32.xlu0 %v243, 12
      %v714 = vpop.permute.xlu0 %713
      %715 = vrot.lane.b32.xlu0 %v245, 12
      %v716 = vpop.permute.xlu0 %715
      %717 = vrot.lane.b32.xlu0 %v246, 12
      %v718 = vpop.permute.xlu0 %717
      %v752 = vrot.slane %v245, 1
      %v753 = vrot.slane %v246, 1
      %v754 = vsel %vm299, %v752, %v753
      %v755 = vrot.slane %v247, 1
      %v756 = vsel %vm299, %v753, %v755
      %757 = vrot.lane.b32.xlu0 %v307, 16
      %v758 = vpop.permute.xlu0 %757
      %759 = vrot.lane.b32.xlu0 %v309, 16
      %v760 = vpop.permute.xlu0 %759
      %761 = vrot.lane.b32.xlu0 %v312, 16
      %v762 = vpop.permute.xlu0 %761
      %763 = vrot.lane.b32.xlu0 %v314, 16
      %v764 = vpop.permute.xlu0 %763
      %765 = vrot.lane.b32.xlu0 %v317, 16
      %v766 = vpop.permute.xlu0 %765
      %767 = vrot.lane.b32.xlu0 %v319, 16
      %v768 = vpop.permute.xlu0 %767
      %769 = vrot.lane.b32.xlu0 %v322, 16
      %v770 = vpop.permute.xlu0 %769
      %771 = vrot.lane.b32.xlu0 %v324, 16
      %v772 = vpop.permute.xlu0 %771
      %773 = vrot.lane.b32.xlu0 %v327, 16
      %v774 = vpop.permute.xlu0 %773
      %775 = vrot.lane.b32.xlu0 %v329, 16
      %v776 = vpop.permute.xlu0 %775
      %777 = vrot.lane.b32.xlu0 %v332, 16
      %v778 = vpop.permute.xlu0 %777
      %779 = vrot.lane.b32.xlu0 %v334, 16
      %v780 = vpop.permute.xlu0 %779
      %781 = vrot.lane.b32.xlu0 %v337, 16
      %v782 = vpop.permute.xlu0 %781
      %783 = vrot.lane.b32.xlu0 %v339, 16
      %v784 = vpop.permute.xlu0 %783
      %785 = vrot.lane.b32.xlu0 %v342, 16
      %v786 = vpop.permute.xlu0 %785
      %787 = vrot.lane.b32.xlu0 %v344, 16
      %v788 = vpop.permute.xlu0 %787
      %789 = vrot.lane.b32.xlu0 %v347, 16
      %v790 = vpop.permute.xlu0 %789
      %791 = vrot.lane.b32.xlu0 %v349, 16
      %v792 = vpop.permute.xlu0 %791
      %793 = vrot.lane.b32.xlu0 %v352, 16
      %v794 = vpop.permute.xlu0 %793
      %795 = vrot.lane.b32.xlu0 %v354, 16
      %v796 = vpop.permute.xlu0 %795
      %797 = vrot.lane.b32.xlu0 %v357, 16
      %v798 = vpop.permute.xlu0 %797
      %799 = vrot.lane.b32.xlu0 %v359, 16
      %v800 = vpop.permute.xlu0 %799
      %801 = vrot.lane.b32.xlu0 %v362, 16
      %v802 = vpop.permute.xlu0 %801
      %803 = vrot.lane.b32.xlu0 %v364, 16
      %v804 = vpop.permute.xlu0 %803
      %805 = vrot.lane.b32.xlu0 %v367, 16
      %v806 = vpop.permute.xlu0 %805
      %807 = vrot.lane.b32.xlu0 %v369, 16
      %v808 = vpop.permute.xlu0 %807
      %809 = vrot.lane.b32.xlu0 %v372, 16
      %v810 = vpop.permute.xlu0 %809
      %811 = vrot.lane.b32.xlu0 %v374, 16
      %v812 = vpop.permute.xlu0 %811
      %813 = vrot.lane.b32.xlu0 %v377, 16
      %v814 = vpop.permute.xlu0 %813
      %815 = vrot.lane.b32.xlu0 %v379, 16
      %v816 = vpop.permute.xlu0 %815
      %817 = vrot.lane.b32.xlu0 %v754, 16
      %v818 = vpop.permute.xlu0 %817
      %819 = vrot.lane.b32.xlu0 %v756, 16
      %v820 = vpop.permute.xlu0 %819
      %v853 = vrot.slane %v245, 2
      %v854 = vrot.slane %v246, 2
      %v855 = vsel %vm476, %v853, %v854
      %v856 = vrot.slane %v247, 2
      %v857 = vsel %vm476, %v854, %v856
      %858 = vrot.lane.b32.xlu0 %v484, 20
      %v859 = vpop.permute.xlu0 %858
      %860 = vrot.lane.b32.xlu0 %v486, 20
      %v861 = vpop.permute.xlu0 %860
      %862 = vrot.lane.b32.xlu0 %v489, 20
      %v863 = vpop.permute.xlu0 %862
      %864 = vrot.lane.b32.xlu0 %v491, 20
      %v865 = vpop.permute.xlu0 %864
      %866 = vrot.lane.b32.xlu0 %v494, 20
      %v867 = vpop.permute.xlu0 %866
      %868 = vrot.lane.b32.xlu0 %v496, 20
      %v869 = vpop.permute.xlu0 %868
      %870 = vrot.lane.b32.xlu0 %v499, 20
      %v871 = vpop.permute.xlu0 %870
      %872 = vrot.lane.b32.xlu0 %v501, 20
      %v873 = vpop.permute.xlu0 %872
      %874 = vrot.lane.b32.xlu0 %v504, 20
      %v875 = vpop.permute.xlu0 %874
      %876 = vrot.lane.b32.xlu0 %v506, 20
      %v877 = vpop.permute.xlu0 %876
      %878 = vrot.lane.b32.xlu0 %v509, 20
      %v879 = vpop.permute.xlu0 %878
      %880 = vrot.lane.b32.xlu0 %v511, 20
      %v881 = vpop.permute.xlu0 %880
      %882 = vrot.lane.b32.xlu0 %v514, 20
      %v883 = vpop.permute.xlu0 %882
      %884 = vrot.lane.b32.xlu0 %v516, 20
      %v885 = vpop.permute.xlu0 %884
      %886 = vrot.lane.b32.xlu0 %v519, 20
      %v887 = vpop.permute.xlu0 %886
      %888 = vrot.lane.b32.xlu0 %v521, 20
      %v889 = vpop.permute.xlu0 %888
      %890 = vrot.lane.b32.xlu0 %v524, 20
      %v891 = vpop.permute.xlu0 %890
      %892 = vrot.lane.b32.xlu0 %v526, 20
      %v893 = vpop.permute.xlu0 %892
      %894 = vrot.lane.b32.xlu0 %v529, 20
      %v895 = vpop.permute.xlu0 %894
      %896 = vrot.lane.b32.xlu0 %v531, 20
      %v897 = vpop.permute.xlu0 %896
      %898 = vrot.lane.b32.xlu0 %v534, 20
      %v899 = vpop.permute.xlu0 %898
      %900 = vrot.lane.b32.xlu0 %v536, 20
      %v901 = vpop.permute.xlu0 %900
      %902 = vrot.lane.b32.xlu0 %v539, 20
      %v903 = vpop.permute.xlu0 %902
      %904 = vrot.lane.b32.xlu0 %v541, 20
      %v905 = vpop.permute.xlu0 %904
      %906 = vrot.lane.b32.xlu0 %v544, 20
      %v907 = vpop.permute.xlu0 %906
      %908 = vrot.lane.b32.xlu0 %v546, 20
      %v909 = vpop.permute.xlu0 %908
      %910 = vrot.lane.b32.xlu0 %v549, 20
      %v911 = vpop.permute.xlu0 %910
      %912 = vrot.lane.b32.xlu0 %v551, 20
      %v913 = vpop.permute.xlu0 %912
      %914 = vrot.lane.b32.xlu0 %v554, 20
      %v915 = vpop.permute.xlu0 %914
      %916 = vrot.lane.b32.xlu0 %v556, 20
      %v917 = vpop.permute.xlu0 %916
      %918 = vrot.lane.b32.xlu0 %v855, 20
      %v919 = vpop.permute.xlu0 %918
      %920 = vrot.lane.b32.xlu0 %v857, 20
      %v921 = vpop.permute.xlu0 %920
      %956 = vrot.lane.b32.xlu0 %v203, 24
      %v957 = vpop.permute.xlu0 %956
      %958 = vrot.lane.b32.xlu0 %v204, 24
      %v959 = vpop.permute.xlu0 %958
      %960 = vrot.lane.b32.xlu0 %v206, 24
      %v961 = vpop.permute.xlu0 %960
      %962 = vrot.lane.b32.xlu0 %v207, 24
      %v963 = vpop.permute.xlu0 %962
      %964 = vrot.lane.b32.xlu0 %v209, 24
      %v965 = vpop.permute.xlu0 %964
      %966 = vrot.lane.b32.xlu0 %v210, 24
      %v967 = vpop.permute.xlu0 %966
      %968 = vrot.lane.b32.xlu0 %v212, 24
      %v969 = vpop.permute.xlu0 %968
      %970 = vrot.lane.b32.xlu0 %v213, 24
      %v971 = vpop.permute.xlu0 %970
      %972 = vrot.lane.b32.xlu0 %v215, 24
      %v973 = vpop.permute.xlu0 %972
      %974 = vrot.lane.b32.xlu0 %v216, 24
      %v975 = vpop.permute.xlu0 %974
      %976 = vrot.lane.b32.xlu0 %v218, 24
      %v977 = vpop.permute.xlu0 %976
      %978 = vrot.lane.b32.xlu0 %v219, 24
      %v979 = vpop.permute.xlu0 %978
      %980 = vrot.lane.b32.xlu0 %v221, 24
      %v981 = vpop.permute.xlu0 %980
      %982 = vrot.lane.b32.xlu0 %v222, 24
      %v983 = vpop.permute.xlu0 %982
      %984 = vrot.lane.b32.xlu0 %v224, 24
      %v985 = vpop.permute.xlu0 %984
      %986 = vrot.lane.b32.xlu0 %v225, 24
      %v987 = vpop.permute.xlu0 %986
      %988 = vrot.lane.b32.xlu0 %v227, 24
      %v989 = vpop.permute.xlu0 %988
      %990 = vrot.lane.b32.xlu0 %v228, 24
      %v991 = vpop.permute.xlu0 %990
      %992 = vrot.lane.b32.xlu0 %v230, 24
      %v993 = vpop.permute.xlu0 %992
      %994 = vrot.lane.b32.xlu0 %v231, 24
      %v995 = vpop.permute.xlu0 %994
      %996 = vrot.lane.b32.xlu0 %v233, 24
      %v997 = vpop.permute.xlu0 %996
      %998 = vrot.lane.b32.xlu0 %v234, 24
      %v999 = vpop.permute.xlu0 %998
      %1000 = vrot.lane.b32.xlu0 %v236, 24
      %v1001 = vpop.permute.xlu0 %1000
      %1002 = vrot.lane.b32.xlu0 %v237, 24
      %v1003 = vpop.permute.xlu0 %1002
      %1004 = vrot.lane.b32.xlu0 %v239, 24
      %v1005 = vpop.permute.xlu0 %1004
      %1006 = vrot.lane.b32.xlu0 %v240, 24
      %v1007 = vpop.permute.xlu0 %1006
      %1008 = vrot.lane.b32.xlu0 %v242, 24
      %v1009 = vpop.permute.xlu0 %1008
      %1010 = vrot.lane.b32.xlu0 %v243, 24
      %v1011 = vpop.permute.xlu0 %1010
      %1012 = vrot.lane.b32.xlu0 %v245, 24
      %v1013 = vpop.permute.xlu0 %1012
      %1014 = vrot.lane.b32.xlu0 %v246, 24
      %v1015 = vpop.permute.xlu0 %1014
      %1016 = vrot.lane.b32.xlu0 %v248, 24
      %v1017 = vpop.permute.xlu0 %1016
      %1018 = vrot.lane.b32.xlu0 %v249, 24
      %v1019 = vpop.permute.xlu0 %1018
      %v1053 = vrot.slane %v248, 1
      %v1054 = vrot.slane %v249, 1
      %v1055 = vsel %vm299, %v1053, %v1054
      %v1056 = vrot.slane %v250, 1
      %v1057 = vsel %vm299, %v1054, %v1056
      %1058 = vrot.lane.b32.xlu0 %v312, 28
      %v1059 = vpop.permute.xlu0 %1058
      %1060 = vrot.lane.b32.xlu0 %v314, 28
      %v1061 = vpop.permute.xlu0 %1060
      %1062 = vrot.lane.b32.xlu0 %v317, 28
      %v1063 = vpop.permute.xlu0 %1062
      %1064 = vrot.lane.b32.xlu0 %v319, 28
      %v1065 = vpop.permute.xlu0 %1064
      %1066 = vrot.lane.b32.xlu0 %v322, 28
      %v1067 = vpop.permute.xlu0 %1066
      %1068 = vrot.lane.b32.xlu0 %v324, 28
      %v1069 = vpop.permute.xlu0 %1068
      %1070 = vrot.lane.b32.xlu0 %v327, 28
      %v1071 = vpop.permute.xlu0 %1070
      %1072 = vrot.lane.b32.xlu0 %v329, 28
      %v1073 = vpop.permute.xlu0 %1072
      %1074 = vrot.lane.b32.xlu0 %v332, 28
      %v1075 = vpop.permute.xlu0 %1074
      %1076 = vrot.lane.b32.xlu0 %v334, 28
      %v1077 = vpop.permute.xlu0 %1076
      %1078 = vrot.lane.b32.xlu0 %v337, 28
      %v1079 = vpop.permute.xlu0 %1078
      %1080 = vrot.lane.b32.xlu0 %v339, 28
      %v1081 = vpop.permute.xlu0 %1080
      %1082 = vrot.lane.b32.xlu0 %v342, 28
      %v1083 = vpop.permute.xlu0 %1082
      %1084 = vrot.lane.b32.xlu0 %v344, 28
      %v1085 = vpop.permute.xlu0 %1084
      %1086 = vrot.lane.b32.xlu0 %v347, 28
      %v1087 = vpop.permute.xlu0 %1086
      %1088 = vrot.lane.b32.xlu0 %v349, 28
      %v1089 = vpop.permute.xlu0 %1088
      %1090 = vrot.lane.b32.xlu0 %v352, 28
      %v1091 = vpop.permute.xlu0 %1090
      %1092 = vrot.lane.b32.xlu0 %v354, 28
      %v1093 = vpop.permute.xlu0 %1092
      %1094 = vrot.lane.b32.xlu0 %v357, 28
      %v1095 = vpop.permute.xlu0 %1094
      %1096 = vrot.lane.b32.xlu0 %v359, 28
      %v1097 = vpop.permute.xlu0 %1096
      %1098 = vrot.lane.b32.xlu0 %v362, 28
      %v1099 = vpop.permute.xlu0 %1098
      %1100 = vrot.lane.b32.xlu0 %v364, 28
      %v1101 = vpop.permute.xlu0 %1100
      %1102 = vrot.lane.b32.xlu0 %v367, 28
      %v1103 = vpop.permute.xlu0 %1102
      %1104 = vrot.lane.b32.xlu0 %v369, 28
      %v1105 = vpop.permute.xlu0 %1104
      %1106 = vrot.lane.b32.xlu0 %v372, 28
      %v1107 = vpop.permute.xlu0 %1106
      %1108 = vrot.lane.b32.xlu0 %v374, 28
      %v1109 = vpop.permute.xlu0 %1108
      %1110 = vrot.lane.b32.xlu0 %v377, 28
      %v1111 = vpop.permute.xlu0 %1110
      %1112 = vrot.lane.b32.xlu0 %v379, 28
      %v1113 = vpop.permute.xlu0 %1112
      %1114 = vrot.lane.b32.xlu0 %v754, 28
      %v1115 = vpop.permute.xlu0 %1114
      %1116 = vrot.lane.b32.xlu0 %v756, 28
      %v1117 = vpop.permute.xlu0 %1116
      %1118 = vrot.lane.b32.xlu0 %v1055, 28
      %v1119 = vpop.permute.xlu0 %1118
      %1120 = vrot.lane.b32.xlu0 %v1057, 28
      %v1121 = vpop.permute.xlu0 %1120
      %v1154 = vrot.slane %v248, 2
      %v1155 = vrot.slane %v249, 2
      %v1156 = vsel %vm476, %v1154, %v1155
      %v1157 = vrot.slane %v250, 2
      %v1158 = vsel %vm476, %v1155, %v1157
      %1159 = vrot.lane.b32.xlu0 %v489, 32
      %v1160 = vpop.permute.xlu0 %1159
      %1161 = vrot.lane.b32.xlu0 %v491, 32
      %v1162 = vpop.permute.xlu0 %1161
      %1163 = vrot.lane.b32.xlu0 %v494, 32
      %v1164 = vpop.permute.xlu0 %1163
      %1165 = vrot.lane.b32.xlu0 %v496, 32
      %v1166 = vpop.permute.xlu0 %1165
      %1167 = vrot.lane.b32.xlu0 %v499, 32
      %v1168 = vpop.permute.xlu0 %1167
      %1169 = vrot.lane.b32.xlu0 %v501, 32
      %v1170 = vpop.permute.xlu0 %1169
      %1171 = vrot.lane.b32.xlu0 %v504, 32
      %v1172 = vpop.permute.xlu0 %1171
      %1173 = vrot.lane.b32.xlu0 %v506, 32
      %v1174 = vpop.permute.xlu0 %1173
      %1175 = vrot.lane.b32.xlu0 %v509, 32
      %v1176 = vpop.permute.xlu0 %1175
      %1177 = vrot.lane.b32.xlu0 %v511, 32
      %v1178 = vpop.permute.xlu0 %1177
      %1179 = vrot.lane.b32.xlu0 %v514, 32
      %v1180 = vpop.permute.xlu0 %1179
      %1181 = vrot.lane.b32.xlu0 %v516, 32
      %v1182 = vpop.permute.xlu0 %1181
      %1183 = vrot.lane.b32.xlu0 %v519, 32
      %v1184 = vpop.permute.xlu0 %1183
      %1185 = vrot.lane.b32.xlu0 %v521, 32
      %v1186 = vpop.permute.xlu0 %1185
      %1187 = vrot.lane.b32.xlu0 %v524, 32
      %v1188 = vpop.permute.xlu0 %1187
      %1189 = vrot.lane.b32.xlu0 %v526, 32
      %v1190 = vpop.permute.xlu0 %1189
      %1191 = vrot.lane.b32.xlu0 %v529, 32
      %v1192 = vpop.permute.xlu0 %1191
      %1193 = vrot.lane.b32.xlu0 %v531, 32
      %v1194 = vpop.permute.xlu0 %1193
      %1195 = vrot.lane.b32.xlu0 %v534, 32
      %v1196 = vpop.permute.xlu0 %1195
      %1197 = vrot.lane.b32.xlu0 %v536, 32
      %v1198 = vpop.permute.xlu0 %1197
      %1199 = vrot.lane.b32.xlu0 %v539, 32
      %v1200 = vpop.permute.xlu0 %1199
      %1201 = vrot.lane.b32.xlu0 %v541, 32
      %v1202 = vpop.permute.xlu0 %1201
      %1203 = vrot.lane.b32.xlu0 %v544, 32
      %v1204 = vpop.permute.xlu0 %1203
      %1205 = vrot.lane.b32.xlu0 %v546, 32
      %v1206 = vpop.permute.xlu0 %1205
      %1207 = vrot.lane.b32.xlu0 %v549, 32
      %v1208 = vpop.permute.xlu0 %1207
      %1209 = vrot.lane.b32.xlu0 %v551, 32
      %v1210 = vpop.permute.xlu0 %1209
      %1211 = vrot.lane.b32.xlu0 %v554, 32
      %v1212 = vpop.permute.xlu0 %1211
      %1213 = vrot.lane.b32.xlu0 %v556, 32
      %v1214 = vpop.permute.xlu0 %1213
      %1215 = vrot.lane.b32.xlu0 %v855, 32
      %v1216 = vpop.permute.xlu0 %1215
      %1217 = vrot.lane.b32.xlu0 %v857, 32
      %v1218 = vpop.permute.xlu0 %1217
      %1219 = vrot.lane.b32.xlu0 %v1156, 32
      %v1220 = vpop.permute.xlu0 %1219
      %1221 = vrot.lane.b32.xlu0 %v1158, 32
      %v1222 = vpop.permute.xlu0 %1221
      %vm1255 = vcmask 31744
      %v1256 = vsel %vm1255, %v197, %v381
      %v1257 = vsel %vm1255, %v198, %v383
      %v1258 = vsel %vm1255, %v200, %v385
      %v1259 = vsel %vm1255, %v201, %v387
      %v1260 = vsel %vm1255, %v203, %v389
      %v1261 = vsel %vm1255, %v204, %v391
      %v1262 = vsel %vm1255, %v206, %v393
      %v1263 = vsel %vm1255, %v207, %v395
      %v1264 = vsel %vm1255, %v209, %v397
      %v1265 = vsel %vm1255, %v210, %v399
      %v1266 = vsel %vm1255, %v212, %v401
      %v1267 = vsel %vm1255, %v213, %v403
      %v1268 = vsel %vm1255, %v215, %v405
      %v1269 = vsel %vm1255, %v216, %v407
      %v1270 = vsel %vm1255, %v218, %v409
      %v1271 = vsel %vm1255, %v219, %v411
      %v1272 = vsel %vm1255, %v221, %v413
      %v1273 = vsel %vm1255, %v222, %v415
      %v1274 = vsel %vm1255, %v224, %v417
      %v1275 = vsel %vm1255, %v225, %v419
      %v1276 = vsel %vm1255, %v227, %v421
      %v1277 = vsel %vm1255, %v228, %v423
      %v1278 = vsel %vm1255, %v230, %v425
      %v1279 = vsel %vm1255, %v231, %v427
      %v1280 = vsel %vm1255, %v233, %v429
      %v1281 = vsel %vm1255, %v234, %v431
      %v1282 = vsel %vm1255, %v236, %v433
      %v1283 = vsel %vm1255, %v237, %v435
      %v1284 = vsel %vm1255, %v239, %v437
      %v1285 = vsel %vm1255, %v240, %v439
      %v1286 = vsel %vm1255, %v242, %v441
      %v1287 = vsel %vm1255, %v243, %v443
      %vm1288 = vcmask 64512
      %v1289 = vsel %vm1288, %v1256, %v558
      %v1290 = vsel %vm1288, %v1257, %v560
      %v1291 = vsel %vm1288, %v1258, %v562
      %v1292 = vsel %vm1288, %v1259, %v564
      %v1293 = vsel %vm1288, %v1260, %v566
      %v1294 = vsel %vm1288, %v1261, %v568
      %v1295 = vsel %vm1288, %v1262, %v570
      %v1296 = vsel %vm1288, %v1263, %v572
      %v1297 = vsel %vm1288, %v1264, %v574
      %v1298 = vsel %vm1288, %v1265, %v576
      %v1299 = vsel %vm1288, %v1266, %v578
      %v1300 = vsel %vm1288, %v1267, %v580
      %v1301 = vsel %vm1288, %v1268, %v582
      %v1302 = vsel %vm1288, %v1269, %v584
      %v1303 = vsel %vm1288, %v1270, %v586
      %v1304 = vsel %vm1288, %v1271, %v588
      %v1305 = vsel %vm1288, %v1272, %v590
      %v1306 = vsel %vm1288, %v1273, %v592
      %v1307 = vsel %vm1288, %v1274, %v594
      %v1308 = vsel %vm1288, %v1275, %v596
      %v1309 = vsel %vm1288, %v1276, %v598
      %v1310 = vsel %vm1288, %v1277, %v600
      %v1311 = vsel %vm1288, %v1278, %v602
      %v1312 = vsel %vm1288, %v1279, %v604
      %v1313 = vsel %vm1288, %v1280, %v606
      %v1314 = vsel %vm1288, %v1281, %v608
      %v1315 = vsel %vm1288, %v1282, %v610
      %v1316 = vsel %vm1288, %v1283, %v612
      %v1317 = vsel %vm1288, %v1284, %v614
      %v1318 = vsel %vm1288, %v1285, %v616
      %v1319 = vsel %vm1288, %v1286, %v618
      %v1320 = vsel %vm1288, %v1287, %v620
      %vm1321 = vcmask 97280
      %v1322 = vsel %vm1321, %v1289, %v656
      %v1323 = vsel %vm1321, %v1290, %v658
      %v1324 = vsel %vm1321, %v1291, %v660
      %v1325 = vsel %vm1321, %v1292, %v662
      %v1326 = vsel %vm1321, %v1293, %v664
      %v1327 = vsel %vm1321, %v1294, %v666
      %v1328 = vsel %vm1321, %v1295, %v668
      %v1329 = vsel %vm1321, %v1296, %v670
      %v1330 = vsel %vm1321, %v1297, %v672
      %v1331 = vsel %vm1321, %v1298, %v674
      %v1332 = vsel %vm1321, %v1299, %v676
      %v1333 = vsel %vm1321, %v1300, %v678
      %v1334 = vsel %vm1321, %v1301, %v680
      %v1335 = vsel %vm1321, %v1302, %v682
      %v1336 = vsel %vm1321, %v1303, %v684
      %v1337 = vsel %vm1321, %v1304, %v686
      %v1338 = vsel %vm1321, %v1305, %v688
      %v1339 = vsel %vm1321, %v1306, %v690
      %v1340 = vsel %vm1321, %v1307, %v692
      %v1341 = vsel %vm1321, %v1308, %v694
      %v1342 = vsel %vm1321, %v1309, %v696
      %v1343 = vsel %vm1321, %v1310, %v698
      %v1344 = vsel %vm1321, %v1311, %v700
      %v1345 = vsel %vm1321, %v1312, %v702
      %v1346 = vsel %vm1321, %v1313, %v704
      %v1347 = vsel %vm1321, %v1314, %v706
      %v1348 = vsel %vm1321, %v1315, %v708
      %v1349 = vsel %vm1321, %v1316, %v710
      %v1350 = vsel %vm1321, %v1317, %v712
      %v1351 = vsel %vm1321, %v1318, %v714
      %v1352 = vsel %vm1321, %v1319, %v716
      %v1353 = vsel %vm1321, %v1320, %v718
      %vm1354 = vcmask 130048
      %v1355 = vsel %vm1354, %v1322, %v758
      %v1356 = vsel %vm1354, %v1323, %v760
      %v1357 = vsel %vm1354, %v1324, %v762
      %v1358 = vsel %vm1354, %v1325, %v764
      %v1359 = vsel %vm1354, %v1326, %v766
      %v1360 = vsel %vm1354, %v1327, %v768
      %v1361 = vsel %vm1354, %v1328, %v770
      %v1362 = vsel %vm1354, %v1329, %v772
      %v1363 = vsel %vm1354, %v1330, %v774
      %v1364 = vsel %vm1354, %v1331, %v776
      %v1365 = vsel %vm1354, %v1332, %v778
      %v1366 = vsel %vm1354, %v1333, %v780
      %v1367 = vsel %vm1354, %v1334, %v782
      %v1368 = vsel %vm1354, %v1335, %v784
      %v1369 = vsel %vm1354, %v1336, %v786
      %v1370 = vsel %vm1354, %v1337, %v788
      %v1371 = vsel %vm1354, %v1338, %v790
      %v1372 = vsel %vm1354, %v1339, %v792
      %v1373 = vsel %vm1354, %v1340, %v794
      %v1374 = vsel %vm1354, %v1341, %v796
      %v1375 = vsel %vm1354, %v1342, %v798
      %v1376 = vsel %vm1354, %v1343, %v800
      %v1377 = vsel %vm1354, %v1344, %v802
      %v1378 = vsel %vm1354, %v1345, %v804
      %v1379 = vsel %vm1354, %v1346, %v806
      %v1380 = vsel %vm1354, %v1347, %v808
      %v1381 = vsel %vm1354, %v1348, %v810
      %v1382 = vsel %vm1354, %v1349, %v812
      %v1383 = vsel %vm1354, %v1350, %v814
      %v1384 = vsel %vm1354, %v1351, %v816
      %v1385 = vsel %vm1354, %v1352, %v818
      %v1386 = vsel %vm1354, %v1353, %v820
      %vm1387 = vcmask 162816
      %v1388 = vsel %vm1387, %v1355, %v859
      %v1389 = vsel %vm1387, %v1356, %v861
      %v1390 = vsel %vm1387, %v1357, %v863
      %v1391 = vsel %vm1387, %v1358, %v865
      %v1392 = vsel %vm1387, %v1359, %v867
      %v1393 = vsel %vm1387, %v1360, %v869
      %v1394 = vsel %vm1387, %v1361, %v871
      %v1395 = vsel %vm1387, %v1362, %v873
      %v1396 = vsel %vm1387, %v1363, %v875
      %v1397 = vsel %vm1387, %v1364, %v877
      %v1398 = vsel %vm1387, %v1365, %v879
      %v1399 = vsel %vm1387, %v1366, %v881
      %v1400 = vsel %vm1387, %v1367, %v883
      %v1401 = vsel %vm1387, %v1368, %v885
      %v1402 = vsel %vm1387, %v1369, %v887
      %v1403 = vsel %vm1387, %v1370, %v889
      %v1404 = vsel %vm1387, %v1371, %v891
      %v1405 = vsel %vm1387, %v1372, %v893
      %v1406 = vsel %vm1387, %v1373, %v895
      %v1407 = vsel %vm1387, %v1374, %v897
      %v1408 = vsel %vm1387, %v1375, %v899
      %v1409 = vsel %vm1387, %v1376, %v901
      %v1410 = vsel %vm1387, %v1377, %v903
      %v1411 = vsel %vm1387, %v1378, %v905
      %v1412 = vsel %vm1387, %v1379, %v907
      %v1413 = vsel %vm1387, %v1380, %v909
      %v1414 = vsel %vm1387, %v1381, %v911
      %v1415 = vsel %vm1387, %v1382, %v913
      %v1416 = vsel %vm1387, %v1383, %v915
      %v1417 = vsel %vm1387, %v1384, %v917
      %v1418 = vsel %vm1387, %v1385, %v919
      %v1419 = vsel %vm1387, %v1386, %v921
      %vm1420 = vcmask 195584
      %v1421 = vsel %vm1420, %v1388, %v957
      %v1422 = vsel %vm1420, %v1389, %v959
      %v1423 = vsel %vm1420, %v1390, %v961
      %v1424 = vsel %vm1420, %v1391, %v963
      %v1425 = vsel %vm1420, %v1392, %v965
      %v1426 = vsel %vm1420, %v1393, %v967
      %v1427 = vsel %vm1420, %v1394, %v969
      %v1428 = vsel %vm1420, %v1395, %v971
      %v1429 = vsel %vm1420, %v1396, %v973
      %v1430 = vsel %vm1420, %v1397, %v975
      %v1431 = vsel %vm1420, %v1398, %v977
      %v1432 = vsel %vm1420, %v1399, %v979
      %v1433 = vsel %vm1420, %v1400, %v981
      %v1434 = vsel %vm1420, %v1401, %v983
      %v1435 = vsel %vm1420, %v1402, %v985
      %v1436 = vsel %vm1420, %v1403, %v987
      %v1437 = vsel %vm1420, %v1404, %v989
      %v1438 = vsel %vm1420, %v1405, %v991
      %v1439 = vsel %vm1420, %v1406, %v993
      %v1440 = vsel %vm1420, %v1407, %v995
      %v1441 = vsel %vm1420, %v1408, %v997
      %v1442 = vsel %vm1420, %v1409, %v999
      %v1443 = vsel %vm1420, %v1410, %v1001
      %v1444 = vsel %vm1420, %v1411, %v1003
      %v1445 = vsel %vm1420, %v1412, %v1005
      %v1446 = vsel %vm1420, %v1413, %v1007
      %v1447 = vsel %vm1420, %v1414, %v1009
      %v1448 = vsel %vm1420, %v1415, %v1011
      %v1449 = vsel %vm1420, %v1416, %v1013
      %v1450 = vsel %vm1420, %v1417, %v1015
      %v1451 = vsel %vm1420, %v1418, %v1017
      %v1452 = vsel %vm1420, %v1419, %v1019
      %vm1453 = vcmask 228352
      %v1454 = vsel %vm1453, %v1421, %v1059
      %v1455 = vsel %vm1453, %v1422, %v1061
      %v1456 = vsel %vm1453, %v1423, %v1063
      %v1457 = vsel %vm1453, %v1424, %v1065
      %v1458 = vsel %vm1453, %v1425, %v1067
      %v1459 = vsel %vm1453, %v1426, %v1069
      %v1460 = vsel %vm1453, %v1427, %v1071
      %v1461 = vsel %vm1453, %v1428, %v1073
      %v1462 = vsel %vm1453, %v1429, %v1075
      %v1463 = vsel %vm1453, %v1430, %v1077
      %v1464 = vsel %vm1453, %v1431, %v1079
      %v1465 = vsel %vm1453, %v1432, %v1081
      %v1466 = vsel %vm1453, %v1433, %v1083
      %v1467 = vsel %vm1453, %v1434, %v1085
      %v1468 = vsel %vm1453, %v1435, %v1087
      %v1469 = vsel %vm1453, %v1436, %v1089
      %v1470 = vsel %vm1453, %v1437, %v1091
      %v1471 = vsel %vm1453, %v1438, %v1093
      %v1472 = vsel %vm1453, %v1439, %v1095
      %v1473 = vsel %vm1453, %v1440, %v1097
      %v1474 = vsel %vm1453, %v1441, %v1099
      %v1475 = vsel %vm1453, %v1442, %v1101
      %v1476 = vsel %vm1453, %v1443, %v1103
      %v1477 = vsel %vm1453, %v1444, %v1105
      %v1478 = vsel %vm1453, %v1445, %v1107
      %v1479 = vsel %vm1453, %v1446, %v1109
      %v1480 = vsel %vm1453, %v1447, %v1111
      %v1481 = vsel %vm1453, %v1448, %v1113
      %v1482 = vsel %vm1453, %v1449, %v1115
      %v1483 = vsel %vm1453, %v1450, %v1117
      %v1484 = vsel %vm1453, %v1451, %v1119
      %v1485 = vsel %vm1453, %v1452, %v1121
      %vm1486 = vcmask 261120
      %v1487 = vsel %vm1486, %v1454, %v1160
      %v1488 = vsel %vm1486, %v1455, %v1162
      %v1489 = vsel %vm1486, %v1456, %v1164
      %v1490 = vsel %vm1486, %v1457, %v1166
      %v1491 = vsel %vm1486, %v1458, %v1168
      %v1492 = vsel %vm1486, %v1459, %v1170
      %v1493 = vsel %vm1486, %v1460, %v1172
      %v1494 = vsel %vm1486, %v1461, %v1174
      %v1495 = vsel %vm1486, %v1462, %v1176
      %v1496 = vsel %vm1486, %v1463, %v1178
      %v1497 = vsel %vm1486, %v1464, %v1180
      %v1498 = vsel %vm1486, %v1465, %v1182
      %v1499 = vsel %vm1486, %v1466, %v1184
      %v1500 = vsel %vm1486, %v1467, %v1186
      %v1501 = vsel %vm1486, %v1468, %v1188
      %v1502 = vsel %vm1486, %v1469, %v1190
      %v1503 = vsel %vm1486, %v1470, %v1192
      %v1504 = vsel %vm1486, %v1471, %v1194
      %v1505 = vsel %vm1486, %v1472, %v1196
      %v1506 = vsel %vm1486, %v1473, %v1198
      %v1507 = vsel %vm1486, %v1474, %v1200
      %v1508 = vsel %vm1486, %v1475, %v1202
      %v1509 = vsel %vm1486, %v1476, %v1204
      %v1510 = vsel %vm1486, %v1477, %v1206
      %v1511 = vsel %vm1486, %v1478, %v1208
      %v1512 = vsel %vm1486, %v1479, %v1210
      %v1513 = vsel %vm1486, %v1480, %v1212
      %v1514 = vsel %vm1486, %v1481, %v1214
      %v1515 = vsel %vm1486, %v1482, %v1216
      %v1516 = vsel %vm1486, %v1483, %v1218
      %v1517 = vsel %vm1486, %v1484, %v1220
      %v1518 = vsel %vm1486, %v1485, %v1222
      %v1519 = vld [vmem:[%s1] sm:$0xff]
      %v1520 = vld [vmem:[%s1 + $0x8] sm:$0xff]
      %v1521 = vld [vmem:[%s1 + $0x10] sm:$0xff]
      %v1522 = vld [vmem:[%s1 + $0x18] sm:$0xff]
      %v1523 = vld [vmem:[%s1 + $0x20] sm:$0xf]
      %v1524 = vmul.f32 %v1519, 0.16666667
      %v1525 = vmul.f32 %v1520, 0.16666667
      %v1526 = vmul.f32 %v1521, 0.16666667
      %v1527 = vmul.f32 %v1522, 0.16666667
      %v1528 = vmul.f32 %v1523, 0.16666667
      %v1529 = vld [vmem:[%s2] sm:$0x1]
      %v1531 = vperm.slane %v1529, 0
      %vm1533 = vcmask 293888
      %v1535 = vsel %vm1533, %v1487, 0
      %v1538 = vsel %vm1533, %v1488, 0
      %v1541 = vsel %vm1533, %v1489, 0
      %v1544 = vsel %vm1533, %v1490, 0
      %v1547 = vsel %vm1533, %v1491, 0
      %v1550 = vsel %vm1533, %v1492, 0
      %v1553 = vsel %vm1533, %v1493, 0
      %v1556 = vsel %vm1533, %v1494, 0
      %v1559 = vsel %vm1533, %v1495, 0
      %v1562 = vsel %vm1533, %v1496, 0
      %v1565 = vsel %vm1533, %v1497, 0
      %v1568 = vsel %vm1533, %v1498, 0
      %v1571 = vsel %vm1533, %v1499, 0
      %v1574 = vsel %vm1533, %v1500, 0
      %v1577 = vsel %vm1533, %v1501, 0
      %v1580 = vsel %vm1533, %v1502, 0
      %v1583 = vsel %vm1533, %v1503, 0
      %v1586 = vsel %vm1533, %v1504, 0
      %v1589 = vsel %vm1533, %v1505, 0
      %v1592 = vsel %vm1533, %v1506, 0
      %v1595 = vsel %vm1533, %v1507, 0
      %v1598 = vsel %vm1533, %v1508, 0
      %v1601 = vsel %vm1533, %v1509, 0
      %v1604 = vsel %vm1533, %v1510, 0
      %v1607 = vsel %vm1533, %v1511, 0
      %v1610 = vsel %vm1533, %v1512, 0
      %v1613 = vsel %vm1533, %v1513, 0
      %v1616 = vsel %vm1533, %v1514, 0
      %v1619 = vsel %vm1533, %v1515, 0
      %v1622 = vsel %vm1533, %v1516, 0
      %v1625 = vsel %vm1533, %v1517, 0
      %v1628 = vsel %vm1533, %v1518, 0
      %vm1630 = vcmask 1043456
      %v1632 = vsel %vm1630, %v1528, 0
      %1634 = vmatpush.msra.mxu0 0.0
      %1635 = vmatpush.msra.mxu0 0.0
      %1636 = vmatpush.msra.mxu0 0.0
      %1637 = vmatpush.msra.mxu0 0.0
      %1638 = vmatpush.msra.mxu0 0.0
      %1639 = vmatpush.msra.mxu0 0.0
      %1640 = vmatpush.msra.mxu0 0.0
      %1641 = vmatpush.msra.mxu0 0.0
      %1642 = vmatpush.msra.mxu0 0.0
      %1643 = vmatpush.msra.mxu0 0.0
      %1644 = vmatpush.msra.mxu0 0.0
      %1645 = vmatpush.msra.mxu0 %v1632
      %1646 = vmatpush.msra.mxu0 %v1527
      %1647 = vmatpush.msra.mxu0 %v1526
      %1648 = vmatpush.msra.mxu0 %v1525
      %1649 = vmatpush.msra.mxu0 %v1524
      %1650 = vmatmul.f32.gmra.mxu0 %v1535
      %v1651 = vpop.f32.mrf.mxu0
      %v1652 = vadd.f32 %v1531, %v1651
      %1653 = vmatmul.f32.gmra.mxu0 %v1538
      %v1654 = vpop.f32.mrf.mxu0
      %v1655 = vadd.f32 %v1531, %v1654
      %1656 = vmatmul.f32.gmra.mxu0 %v1541
      %v1657 = vpop.f32.mrf.mxu0
      %v1658 = vadd.f32 %v1531, %v1657
      %1659 = vmatmul.f32.gmra.mxu0 %v1544
      %v1660 = vpop.f32.mrf.mxu0
      %v1661 = vadd.f32 %v1531, %v1660
      %1662 = vmatmul.f32.gmra.mxu0 %v1547
      %v1663 = vpop.f32.mrf.mxu0
      %v1664 = vadd.f32 %v1531, %v1663
      %1665 = vmatmul.f32.gmra.mxu0 %v1550
      %v1666 = vpop.f32.mrf.mxu0
      %v1667 = vadd.f32 %v1531, %v1666
      %1668 = vmatmul.f32.gmra.mxu0 %v1553
      %v1669 = vpop.f32.mrf.mxu0
      %v1670 = vadd.f32 %v1531, %v1669
      %1671 = vmatmul.f32.gmra.mxu0 %v1556
      %v1672 = vpop.f32.mrf.mxu0
      %v1673 = vadd.f32 %v1531, %v1672
      %1674 = vmatmul.f32.gmra.mxu0 %v1559
      %v1675 = vpop.f32.mrf.mxu0
      %v1676 = vadd.f32 %v1531, %v1675
      %1677 = vmatmul.f32.gmra.mxu0 %v1562
      %v1678 = vpop.f32.mrf.mxu0
      %v1679 = vadd.f32 %v1531, %v1678
      %1680 = vmatmul.f32.gmra.mxu0 %v1565
      %v1681 = vpop.f32.mrf.mxu0
      %v1682 = vadd.f32 %v1531, %v1681
      %1683 = vmatmul.f32.gmra.mxu0 %v1568
      %v1684 = vpop.f32.mrf.mxu0
      %v1685 = vadd.f32 %v1531, %v1684
      %1686 = vmatmul.f32.gmra.mxu0 %v1571
      %v1687 = vpop.f32.mrf.mxu0
      %v1688 = vadd.f32 %v1531, %v1687
      %1689 = vmatmul.f32.gmra.mxu0 %v1574
      %v1690 = vpop.f32.mrf.mxu0
      %v1691 = vadd.f32 %v1531, %v1690
      %1692 = vmatmul.f32.gmra.mxu0 %v1577
      %v1693 = vpop.f32.mrf.mxu0
      %v1694 = vadd.f32 %v1531, %v1693
      %1695 = vmatmul.f32.gmra.mxu0 %v1580
      %v1696 = vpop.f32.mrf.mxu0
      %v1697 = vadd.f32 %v1531, %v1696
      %1698 = vmatmul.f32.gmra.mxu0 %v1583
      %v1699 = vpop.f32.mrf.mxu0
      %v1700 = vadd.f32 %v1531, %v1699
      %1701 = vmatmul.f32.gmra.mxu0 %v1586
      %v1702 = vpop.f32.mrf.mxu0
      %v1703 = vadd.f32 %v1531, %v1702
      %1704 = vmatmul.f32.gmra.mxu0 %v1589
      %v1705 = vpop.f32.mrf.mxu0
      %v1706 = vadd.f32 %v1531, %v1705
      %1707 = vmatmul.f32.gmra.mxu0 %v1592
      %v1708 = vpop.f32.mrf.mxu0
      %v1709 = vadd.f32 %v1531, %v1708
      %1710 = vmatmul.f32.gmra.mxu0 %v1595
      %v1711 = vpop.f32.mrf.mxu0
      %v1712 = vadd.f32 %v1531, %v1711
      %1713 = vmatmul.f32.gmra.mxu0 %v1598
      %v1714 = vpop.f32.mrf.mxu0
      %v1715 = vadd.f32 %v1531, %v1714
      %1716 = vmatmul.f32.gmra.mxu0 %v1601
      %v1717 = vpop.f32.mrf.mxu0
      %v1718 = vadd.f32 %v1531, %v1717
      %1719 = vmatmul.f32.gmra.mxu0 %v1604
      %v1720 = vpop.f32.mrf.mxu0
      %v1721 = vadd.f32 %v1531, %v1720
      %1722 = vmatmul.f32.gmra.mxu0 %v1607
      %v1723 = vpop.f32.mrf.mxu0
      %v1724 = vadd.f32 %v1531, %v1723
      %1725 = vmatmul.f32.gmra.mxu0 %v1610
      %v1726 = vpop.f32.mrf.mxu0
      %v1727 = vadd.f32 %v1531, %v1726
      %1728 = vmatmul.f32.gmra.mxu0 %v1613
      %v1729 = vpop.f32.mrf.mxu0
      %v1730 = vadd.f32 %v1531, %v1729
      %1731 = vmatmul.f32.gmra.mxu0 %v1616
      %v1732 = vpop.f32.mrf.mxu0
      %v1733 = vadd.f32 %v1531, %v1732
      %1734 = vmatmul.f32.gmra.mxu0 %v1619
      %v1735 = vpop.f32.mrf.mxu0
      %v1736 = vadd.f32 %v1531, %v1735
      %1737 = vmatmul.f32.gmra.mxu0 %v1622
      %v1738 = vpop.f32.mrf.mxu0
      %v1739 = vadd.f32 %v1531, %v1738
      %1740 = vmatmul.f32.gmra.mxu0 %v1625
      %v1741 = vpop.f32.mrf.mxu0
      %v1742 = vadd.f32 %v1531, %v1741
      %1743 = vmatmul.f32.gmra.mxu0 %v1628
      %v1744 = vpop.f32.mrf.mxu0
      %v1745 = vadd.f32 %v1531, %v1744
      %1746 = vdwg.mxu0
      %1747 = vst [vmem:[%s192] sm:$0xff] %v1652
      %1748 = vst [vmem:[%s192 + $0x8] sm:$0xff] %v1655
      %1749 = vst [vmem:[%s192 + $0x10] sm:$0xff] %v1658
      %1750 = vst [vmem:[%s192 + $0x18] sm:$0xff] %v1661
      %1751 = vst [vmem:[%s192 + $0x20] sm:$0xff] %v1664
      %1752 = vst [vmem:[%s192 + $0x28] sm:$0xff] %v1667
      %1753 = vst [vmem:[%s192 + $0x30] sm:$0xff] %v1670
      %1754 = vst [vmem:[%s192 + $0x38] sm:$0xff] %v1673
      %1755 = vst [vmem:[%s192 + $0x40] sm:$0xff] %v1676
      %1756 = vst [vmem:[%s192 + $0x48] sm:$0xff] %v1679
      %1757 = vst [vmem:[%s192 + $0x50] sm:$0xff] %v1682
      %1758 = vst [vmem:[%s192 + $0x58] sm:$0xff] %v1685
      %1759 = vst [vmem:[%s192 + $0x60] sm:$0xff] %v1688
      %1760 = vst [vmem:[%s192 + $0x68] sm:$0xff] %v1691
      %1761 = vst [vmem:[%s192 + $0x70] sm:$0xff] %v1694
      %1762 = vst [vmem:[%s192 + $0x78] sm:$0xff] %v1697
      %1763 = vst [vmem:[%s192 + $0x80] sm:$0xff] %v1700
      %1764 = vst [vmem:[%s192 + $0x88] sm:$0xff] %v1703
      %1765 = vst [vmem:[%s192 + $0x90] sm:$0xff] %v1706
      %1766 = vst [vmem:[%s192 + $0x98] sm:$0xff] %v1709
      %1767 = vst [vmem:[%s192 + $0xa0] sm:$0xff] %v1712
      %1768 = vst [vmem:[%s192 + $0xa8] sm:$0xff] %v1715
      %1769 = vst [vmem:[%s192 + $0xb0] sm:$0xff] %v1718
      %1770 = vst [vmem:[%s192 + $0xb8] sm:$0xff] %v1721
      %1771 = vst [vmem:[%s192 + $0xc0] sm:$0xff] %v1724
      %1772 = vst [vmem:[%s192 + $0xc8] sm:$0xff] %v1727
      %1773 = vst [vmem:[%s192 + $0xd0] sm:$0xff] %v1730
      %1774 = vst [vmem:[%s192 + $0xd8] sm:$0xff] %v1733
      %1775 = vst [vmem:[%s192 + $0xe0] sm:$0xff] %v1736
      %1776 = vst [vmem:[%s192 + $0xe8] sm:$0xff] %v1739
      %1777 = vst [vmem:[%s192 + $0xf0] sm:$0xff] %v1742
      %1778 = vst [vmem:[%s192 + $0xf8] sm:$0xff] %v1745
      %s1779 = smul.u32 32, %s19
      %p1780 = scmp.lt.s32.totalorder %s18, 1
      %s1781 = scalar_select %p1780, %s18, 1
      %p1782 = scmp.lt.s32.totalorder %s1779, 31
      %s1783 = scalar_select %p1782, %s1779, 31
      %s1784 = smul.addr %s1781, 32
      %s1785 = sadd.s32 %s1783, %s1784
      %s1786 = smul.addr %s1785, 8
      %s1787 = scalar_lea.vmem %s3, %s1786
      // Predicated region
      $region33: #{equal_conv2d.1} parent=31 // pred_check
        %p1788 = pneg %p114
      $region34: #{equal_conv2d.1} parent=31 // pred_check_branch
        %1790 = sbr.rel (%p1788) target = $region36
      $region35: #{equal_conv2d.1} parent=31 // pred_region
        %s1791 = smul.u32 32, %s19
      $region36: #{equal_conv2d.1} parent=31 // pred_fallthru
        _
    $region32: #{equal_conv2d.1} parent=5 // pred_fallthru
      _
    %p1792 = scmp.le.s32.totalorder 2, %s9
    // Predicated region
    $region37: #{equal_conv2d.1} parent=5 // pred_check
      %p1793 = pneg %p1792
    $region38: #{equal_conv2d.1} parent=5 // pred_check_branch
      %1795 = sbr.rel (%p1793) target = $region40
    $region39: #{equal_conv2d.1} parent=5 // pred_region
      %s1796 = ssub.s32 %s9, 2
      // Predicated region
      $region41: #{equal_conv2d.1} parent=39 // pred_check
        %p1797 = pneg %p120
      $region42: #{equal_conv2d.1} parent=39 // pred_check_branch
        %1799 = sbr.rel (%p1797) target = $region44
      $region43: #{equal_conv2d.1} parent=39 // pred_region
        %s1800 = smul.u32 32, %s21
        %p1801 = scmp.lt.s32.totalorder %s20, 1
        %s1802 = scalar_select %p1801, %s20, 1
        %p1803 = scmp.lt.s32.totalorder %s1800, 31
        %s1804 = scalar_select %p1803, %s1800, 31
        %s1805 = smul.addr %s1802, 32
        %s1806 = sadd.s32 %s1804, %s1805
        %s1807 = smul.addr %s1806, 8
        %s1808 = scalar_lea.vmem %s3, %s1807
      $region44: #{equal_conv2d.1} parent=39 // pred_fallthru
        _
    $region40: #{equal_conv2d.1} parent=5 // pred_fallthru
      _
  $region6: #{equal_conv2d.1} parent=0 // loop_footer
    %s13 = sadd.s32 1, %s9
  $region7: #{equal_conv2d.1} parent=0 // loop_footer_branch
    %8 = sbr.rel target = $region3
  $region8: #{equal_conv2d.1} parent=0 // loop_exit
    _

</llo_original>
